<compile_context>
chip_gen: v7x
topology: tpu7x:2x2x1
jax: 0.10.0
libtpu: 0.0.40
codegen_flags: <defaults>
</compile_context>

<pallas_src>
import math
import functools

import jax
import jax.numpy as jnp
from jax import lax
from jax.experimental import pallas as pl
from jax.experimental.pallas import tpu as pltpu


_VMEM_LIMIT_BYTES = 48 * 1024 * 1024  # headroom on v5e/v6e (128 MiB) and v7x (64 MiB)
_LN_EPS = 1e-5


def _compiler_params(dimension_semantics):
    return pltpu.CompilerParams(
        dimension_semantics=dimension_semantics,
        vmem_limit_bytes=_VMEM_LIMIT_BYTES,
    )


def _pick_tile(dim, preferred):
    """Largest preferred tile that evenly divides `dim`, else the full dim."""
    for t in preferred:
        if dim >= t and dim % t == 0:
            return t
    return dim


# ----------------------------- Pallas kernels ------------------------------

def _linear_kernel(x_ref, w_ref, b_ref, o_ref):
    # x: (tm, K) f32, w: (K, tn) bf16, b: (1, tn) f32 -> o: (tm, tn) f32
    x = x_ref[...].astype(jnp.bfloat16)          # bf16 MXU inputs, f32 accumulation
    y = jnp.dot(x, w_ref[...], preferred_element_type=jnp.float32)
    y = y + b_ref[...].astype(jnp.float32)
    o_ref[...] = y.astype(o_ref.dtype)


def linear(x, w, b):
    M, K = x.shape
    N = w.shape[1]
    tm = _pick_tile(M, (512, 256, 128))
    tn = _pick_tile(N, (256, 128))
    grid = (M // tm, N // tn)
    return pl.pallas_call(
        _linear_kernel,
        grid=grid,
        in_specs=[
            pl.BlockSpec((tm, K), lambda i, j: (i, 0)),
            pl.BlockSpec((K, tn), lambda i, j: (0, j)),
            pl.BlockSpec((1, tn), lambda i, j: (0, j)),
        ],
        out_specs=pl.BlockSpec((tm, tn), lambda i, j: (i, j)),
        out_shape=jax.ShapeDtypeStruct((M, N), jnp.float32),
        compiler_params=_compiler_params(("parallel", "parallel")),
    )(x, w, b.reshape(1, N))


def _attn_block_kernel(x_ref, q_ref, k_ref, v_ref, wo_ref, bo_ref, g_ref, b_ref,
                       o_ref, *, scale, eps):
    # Fused per-batch-element: causal MHA -> Wo projection -> +residual -> LayerNorm.
    # Blocks: x (1, T, D); q/k/v (1, H, T, Dh); wo (H, Dh, D).
    q = q_ref[0].astype(jnp.bfloat16)            # (H, T, Dh)
    k = k_ref[0].astype(jnp.bfloat16)
    v = v_ref[0].astype(jnp.bfloat16)
    T = q.shape[1]

    # Batched over heads, contracting on Dh -> no explicit k.T / XLU transpose.
    s = jnp.einsum("htd,hsd->hts", q, k, preferred_element_type=jnp.float32) * scale
    row = lax.broadcasted_iota(jnp.int32, (1, T, T), 1)
    col = lax.broadcasted_iota(jnp.int32, (1, T, T), 2)
    s = jnp.where(col <= row, s, jnp.float32(-1e30))          # causal mask (f32 scores)

    m = jnp.max(s, axis=-1, keepdims=True)
    p = jnp.exp(s - m)
    denom = jnp.sum(p, axis=-1, keepdims=True)
    ctx = jnp.einsum("hts,hsd->htd", p.astype(jnp.bfloat16), v,
                     preferred_element_type=jnp.float32)       # (H, T, Dh) f32
    ctx = ctx * pl.reciprocal(denom, approx=True)

    # Output projection as per-head batched matmul + sum over heads
    # (avoids an in-kernel (H,T,Dh)->(T,D) lane reshape).
    proj = jnp.einsum("htd,hdo->hto", ctx.astype(jnp.bfloat16), wo_ref[...],
                      preferred_element_type=jnp.float32)      # (H, T, D)
    y = jnp.sum(proj, axis=0) + bo_ref[...].astype(jnp.float32)  # (T, D)

    # Residual add + LayerNorm (stats in f32).
    r = x_ref[0].astype(jnp.float32) + y
    mean = jnp.mean(r, axis=-1, keepdims=True)
    c = r - mean
    var = jnp.mean(c * c, axis=-1, keepdims=True)
    o_ref[0] = (c * lax.rsqrt(var + eps) * g_ref[...] + b_ref[...]).astype(o_ref.dtype)


def attention_block(x, q, k, v, wo, bo, ln_g, ln_b, eps=_LN_EPS):
    # x: (B, T, D) residual; q/k/v: (B, H, T, Dh)
    # TODO(synk): at long context, switch to flash-style KV tiling (online softmax)
    #             to avoid the O(T^2) score matrix in VMEM.
    B, H, T, Dh = q.shape
    D = H * Dh
    scale = 1.0 / math.sqrt(Dh)
    wo_r = wo.reshape(H, Dh, D)
    qkv_spec = pl.BlockSpec((1, H, T, Dh), lambda b: (b, 0, 0, 0))
    vec_spec = pl.BlockSpec((1, D), lambda b: (0, 0))
    return pl.pallas_call(
        functools.partial(_attn_block_kernel, scale=scale, eps=eps),
        grid=(B,),
        in_specs=[
            pl.BlockSpec((1, T, D), lambda b: (b, 0, 0)),
            qkv_spec, qkv_spec, qkv_spec,
            pl.BlockSpec((H, Dh, D), lambda b: (0, 0, 0)),
            vec_spec, vec_spec, vec_spec,
        ],
        out_specs=pl.BlockSpec((1, T, D), lambda b: (b, 0, 0)),
        out_shape=jax.ShapeDtypeStruct((B, T, D), jnp.float32),
        compiler_params=_compiler_params(("parallel",)),
    )(x, q, k, v, wo_r, bo.reshape(1, D), ln_g.reshape(1, D), ln_b.reshape(1, D))


def _ffn_add_ln_kernel(x_ref, w1_ref, b1_ref, w2_ref, b2_ref, g_ref, b_ref, o_ref, *, eps):
    # Fused MLP + residual add + LayerNorm; hidden activation stays in VMEM/vregs.
    x = x_ref[...].astype(jnp.float32)
    h = jnp.dot(x.astype(jnp.bfloat16), w1_ref[...], preferred_element_type=jnp.float32)
    h = jnp.maximum(h + b1_ref[...].astype(jnp.float32), 0.0)
    y = jnp.dot(h.astype(jnp.bfloat16), w2_ref[...], preferred_element_type=jnp.float32)
    y = y + b2_ref[...].astype(jnp.float32)
    r = x + y
    mean = jnp.mean(r, axis=-1, keepdims=True)
    c = r - mean
    var = jnp.mean(c * c, axis=-1, keepdims=True)
    o_ref[...] = (c * lax.rsqrt(var + eps) * g_ref[...] + b_ref[...]).astype(o_ref.dtype)


def ffn_add_ln(x, w1, b1, w2, b2, ln_g, ln_b, eps=_LN_EPS):
    M, D = x.shape
    H = w1.shape[1]
    tm = _pick_tile(M, (512, 256, 128))
    return pl.pallas_call(
        functools.partial(_ffn_add_ln_kernel, eps=eps),
        grid=(M // tm,),
        in_specs=[
            pl.BlockSpec((tm, D), lambda i: (i, 0)),
            pl.BlockSpec((D, H), lambda i: (0, 0)),
            pl.BlockSpec((1, H), lambda i: (0, 0)),
            pl.BlockSpec((H, D), lambda i: (0, 0)),
            pl.BlockSpec((1, D), lambda i: (0, 0)),
            pl.BlockSpec((1, D), lambda i: (0, 0)),
            pl.BlockSpec((1, D), lambda i: (0, 0)),
        ],
        out_specs=pl.BlockSpec((tm, D), lambda i: (i, 0)),
        out_shape=jax.ShapeDtypeStruct((M, D), jnp.float32),
        compiler_params=_compiler_params(("parallel",)),
    )(x, w1, b1.reshape(1, H), w2, b2.reshape(1, D),
      ln_g.reshape(1, D), ln_b.reshape(1, D))


def _ln_linear_kernel(x_ref, g_ref, b_ref, w_ref, bias_ref, o_ref, *, eps):
    # Fused LayerNorm + decoder matmul.
    x = x_ref[...].astype(jnp.float32)
    mean = jnp.mean(x, axis=-1, keepdims=True)
    c = x - mean
    var = jnp.mean(c * c, axis=-1, keepdims=True)
    xn = c * lax.rsqrt(var + eps) * g_ref[...] + b_ref[...]
    y = jnp.dot(xn.astype(jnp.bfloat16), w_ref[...], preferred_element_type=jnp.float32)
    o_ref[...] = (y + bias_ref[...].astype(jnp.float32)).astype(o_ref.dtype)


def ln_linear(x, ln_g, ln_b, w, bias, eps=_LN_EPS):
    M, K = x.shape
    N = w.shape[1]
    tm = _pick_tile(M, (512, 256, 128))
    tn = _pick_tile(N, (256, 128))
    grid = (M // tm, N // tn)
    return pl.pallas_call(
        functools.partial(_ln_linear_kernel, eps=eps),
        grid=grid,
        in_specs=[
            pl.BlockSpec((tm, K), lambda i, j: (i, 0)),
            pl.BlockSpec((1, K), lambda i, j: (0, 0)),
            pl.BlockSpec((1, K), lambda i, j: (0, 0)),
            pl.BlockSpec((K, tn), lambda i, j: (0, j)),
            pl.BlockSpec((1, tn), lambda i, j: (0, j)),
        ],
        out_specs=pl.BlockSpec((tm, tn), lambda i, j: (i, j)),
        out_shape=jax.ShapeDtypeStruct((M, N), jnp.float32),
        compiler_params=_compiler_params(("parallel", "parallel")),
    )(x, ln_g.reshape(1, K), ln_b.reshape(1, K), w, bias.reshape(1, N))


# ----------------------------- Model (glue) --------------------------------

def sinusoidal_pos_encoding(context_len, d):
    pos = jnp.arange(context_len, dtype=jnp.float32)[:, None]
    div = jnp.exp(jnp.arange(0, d, 2, dtype=jnp.float32) * (-math.log(10000.0) / d))
    pe = jnp.zeros((context_len, d), dtype=jnp.float32)
    pe = pe.at[:, 0::2].set(jnp.sin(pos * div))
    pe = pe.at[:, 1::2].set(jnp.cos(pos * div))
    return pe


def init_params(key, num_token, model_dim, num_head, num_hidden, num_blocks):
    # Weights stored in bf16 (MXU inputs); biases / LN params / embedding in f32.
    def nrm(k, shape, scale=0.02, dtype=jnp.bfloat16):
        return (scale * jax.random.normal(k, shape, dtype=jnp.float32)).astype(dtype)

    keys = jax.random.split(key, 2 + num_blocks)
    params = {
        "embedding": nrm(keys[0], (num_token, model_dim), 1.0, jnp.float32),
        "dec_w": nrm(keys[1], (model_dim, num_token)),
        "dec_b": jnp.zeros((num_token,), jnp.float32),
        "final_g": jnp.ones((model_dim,), jnp.float32),
        "final_b": jnp.zeros((model_dim,), jnp.float32),
        "blocks": [],
    }
    for bi in range(num_blocks):
        bk = jax.random.split(keys[2 + bi], 4)
        blk = {
            # fused QKV weight: columns are [Wq | Wk | Wv]
            "wqkv": nrm(bk[0], (model_dim, 3 * model_dim)),
            "bqkv": jnp.zeros((3 * model_dim,), jnp.float32),
            "wo": nrm(bk[1], (model_dim, model_dim)),
            "bo": jnp.zeros((model_dim,), jnp.float32),
            "w1": nrm(bk[2], (model_dim, num_hidden)),
            "b1": jnp.zeros((num_hidden,), jnp.float32),
            "w2": nrm(bk[3], (num_hidden, model_dim)),
            "b2": jnp.zeros((model_dim,), jnp.float32),
            "ln1_g": jnp.ones((model_dim,), jnp.float32),
            "ln1_b": jnp.zeros((model_dim,), jnp.float32),
            "ln2_g": jnp.ones((model_dim,), jnp.float32),
            "ln2_b": jnp.zeros((model_dim,), jnp.float32),
        }
        params["blocks"].append(blk)
    return params


def transformer_block(x, blk, num_head):
    # x: (B, T, D)
    B, T, D = x.shape
    Dh = D // num_head
    xf = x.reshape(B * T, D)

    # fused QKV projection: single (D, 3D) matmul
    qkv = linear(xf, blk["wqkv"], blk["bqkv"])                 # (B*T, 3D)
    qkv = qkv.reshape(B, T, 3, num_head, Dh)
    q = qkv[:, :, 0].transpose(0, 2, 1, 3)                     # (B, H, T, Dh)
    k = qkv[:, :, 1].transpose(0, 2, 1, 3)
    v = qkv[:, :, 2].transpose(0, 2, 1, 3)

    # fused: causal MHA + Wo projection + residual + LN1  (one kernel)
    x1 = attention_block(x, q, k, v, blk["wo"], blk["bo"],
                         blk["ln1_g"], blk["ln1_b"])           # (B, T, D)

    # fused: FFN + residual + LN2  (one kernel)
    x2 = ffn_add_ln(x1.reshape(B * T, D), blk["w1"], blk["b1"],
                    blk["w2"], blk["b2"], blk["ln2_g"], blk["ln2_b"])
    return x2.reshape(B, T, D)


def gpt_forward(params, tokens, *, num_head, context_len):
    # tokens: (B, T) int32
    B, T = tokens.shape
    D = params["embedding"].shape[1]

    # token embedding gather (XLA glue) scaled by sqrt(D), plus sinusoidal PE
    emb = jnp.take(params["embedding"], tokens, axis=0) * math.sqrt(D)
    pe = sinusoidal_pos_encoding(context_len, D)[:T]
    x = emb + pe[None, :, :]

    for blk in params["blocks"]:
        x = transformer_block(x, blk, num_head)

    # fused final LayerNorm + decoder matmul (M/N tiled)
    logits = ln_linear(x.reshape(B * T, D), params["final_g"], params["final_b"],
                       params["dec_w"], params["dec_b"])
    num_token = params["dec_w"].shape[1]
    return logits.reshape(B, T, num_token)


# --------------------------------- main -------------------------------------

if __name__ == "__main__":
    num_token = 64
    model_dim = 32
    num_head = 4
    num_hidden = 64
    num_blocks = 2
    context_len = 16
    B, T = 2, 8

    key = jax.random.PRNGKey(0)
    pkey, tkey = jax.random.split(key)
    params = init_params(pkey, num_token, model_dim, num_head, num_hidden, num_blocks)
    tokens = jax.random.randint(tkey, (B, T), 0, num_token, dtype=jnp.int32)

    fwd = jax.jit(functools.partial(gpt_forward, num_head=num_head, context_len=context_len))
    logits = fwd(params, tokens)
    logits = jax.block_until_ready(logits)

    assert logits.shape == (B, T, num_token), logits.shape
    assert bool(jnp.all(jnp.isfinite(logits)))
    print("KERNEL_OK")
</pallas_src>

<mosaic_0001>
module attributes {stable_mosaic.version = 11 : i64} {
  func.func @_linear_kernel(%arg0: i32, %arg1: i32, %arg2: memref<16x32xf32, #tpu.memory_space<vmem>>, %arg3: memref<32x96xbf16, #tpu.memory_space<vmem>>, %arg4: memref<1x96xf32, #tpu.memory_space<vmem>>, %arg5: memref<16x96xf32, #tpu.memory_space<vmem>>) attributes {dimension_semantics = [#tpu.dimension_semantics<parallel>, #tpu.dimension_semantics<parallel>], iteration_bounds = array<i64: 1, 1>, scalar_prefetch = 0 : i64, scratch_operands = 0 : i64, tpu.core_type = #tpu.core_type<tc>, window_params = [{transform_indices = @transform_0, window_bounds = array<i64: 16, 32>}, {transform_indices = @transform_1, window_bounds = array<i64: 32, 96>}, {transform_indices = @transform_2, window_bounds = array<i64: 1, 96>}, {transform_indices = @transform_3, window_bounds = array<i64: 16, 96>}]} {
    %c0 = arith.constant 0 : index
    %c0_0 = arith.constant 0 : index
    %0 = vector.load %arg2[%c0, %c0_0] : memref<16x32xf32, #tpu.memory_space<vmem>>, vector<16x32xf32>
    %1 = arith.truncf %0 : vector<16x32xf32> to vector<16x32xbf16>
    %c0_1 = arith.constant 0 : index
    %c0_2 = arith.constant 0 : index
    %2 = vector.load %arg3[%c0_1, %c0_2] : memref<32x96xbf16, #tpu.memory_space<vmem>>, vector<32x96xbf16>
    %cst = arith.constant dense<0.000000e+00> : vector<16x96xf32>
    %3 = tpu.matmul %1, %2, %cst {dimension_numbers = #tpu.dot_dimension_numbers<[1], [0], [0], [1], [0, 0, 1, 1], [], []>} : vector<16x32xbf16>, vector<32x96xbf16>, vector<16x96xf32> -> vector<16x96xf32>
    %c0_3 = arith.constant 0 : index
    %c0_4 = arith.constant 0 : index
    %4 = vector.load %arg4[%c0_3, %c0_4] : memref<1x96xf32, #tpu.memory_space<vmem>>, vector<1x96xf32>
    %5 = vector.broadcast %4 : vector<1x96xf32> to vector<16x96xf32>
    %6 = arith.addf %3, %5 : vector<16x96xf32>
    %c0_5 = arith.constant 0 : index
    %c0_6 = arith.constant 0 : index
    %7 = vector.load %arg5[%c0_5, %c0_6] : memref<16x96xf32, #tpu.memory_space<vmem>>, vector<16x96xf32>
    tpu.vector_store %arg5[%c0_5, %c0_6], %6 {strides = array<i32>} : memref<16x96xf32, #tpu.memory_space<vmem>>, vector<16x96xf32>,
    return
  }
  func.func @transform_0(%arg0: i32, %arg1: i32) -> (i32, i32) {
    %c0_i32 = arith.constant 0 : i32
    %c0_i32_0 = arith.constant 0 : i32
    return %arg0, %c0_i32 : i32, i32
  }
  func.func @transform_1(%arg0: i32, %arg1: i32) -> (i32, i32) {
    %c0_i32 = arith.constant 0 : i32
    %c0_i32_0 = arith.constant 0 : i32
    return %c0_i32, %arg1 : i32, i32
  }
  func.func @transform_2(%arg0: i32, %arg1: i32) -> (i32, i32) {
    %c0_i32 = arith.constant 0 : i32
    %c0_i32_0 = arith.constant 0 : i32
    return %c0_i32, %arg1 : i32, i32
  }
  func.func @transform_3(%arg0: i32, %arg1: i32) -> (i32, i32) {
    %c0_i32 = arith.constant 0 : i32
    return %arg0, %arg1 : i32, i32
  }
}

module attributes {stable_mosaic.version = 11 : i64} {
  func.func @_attn_block_kernel(%arg0: i32, %arg1: memref<1x8x32xf32, #tpu.memory_space<vmem>>, %arg2: memref<1x4x8x8xf32, #tpu.memory_space<vmem>>, %arg3: memref<1x4x8x8xf32, #tpu.memory_space<vmem>>, %arg4: memref<1x4x8x8xf32, #tpu.memory_space<vmem>>, %arg5: memref<4x8x32xbf16, #tpu.memory_space<vmem>>, %arg6: memref<1x32xf32, #tpu.memory_space<vmem>>, %arg7: memref<1x32xf32, #tpu.memory_space<vmem>>, %arg8: memref<1x32xf32, #tpu.memory_space<vmem>>, %arg9: memref<1x8x32xf32, #tpu.memory_space<vmem>>) attributes {dimension_semantics = [#tpu.dimension_semantics<parallel>], iteration_bounds = array<i64: 2>, scalar_prefetch = 0 : i64, scratch_operands = 0 : i64, tpu.core_type = #tpu.core_type<tc>, window_params = [{transform_indices = @transform_0, window_bounds = array<i64: 1, 8, 32>}, {transform_indices = @transform_1, window_bounds = array<i64: 1, 4, 8, 8>}, {transform_indices = @transform_2, window_bounds = array<i64: 1, 4, 8, 8>}, {transform_indices = @transform_3, window_bounds = array<i64: 1, 4, 8, 8>}, {pipeline_mode = #tpu.pipeline_mode<synchronous>, transform_indices = @transform_4, window_bounds = array<i64: 4, 8, 32>}, {pipeline_mode = #tpu.pipeline_mode<synchronous>, transform_indices = @transform_5, window_bounds = array<i64: 1, 32>}, {pipeline_mode = #tpu.pipeline_mode<synchronous>, transform_indices = @transform_6, window_bounds = array<i64: 1, 32>}, {pipeline_mode = #tpu.pipeline_mode<synchronous>, transform_indices = @transform_7, window_bounds = array<i64: 1, 32>}, {transform_indices = @transform_8, window_bounds = array<i64: 1, 8, 32>}]} {
    %c0 = arith.constant 0 : index
    %c0_0 = arith.constant 0 : index
    %c0_1 = arith.constant 0 : index
    %c0_2 = arith.constant 0 : index
    %0 = vector.load %arg2[%c0, %c0_0, %c0_1, %c0_2] : memref<1x4x8x8xf32, #tpu.memory_space<vmem>>, vector<1x4x8x8xf32>
    %1 = vector.shape_cast %0 : vector<1x4x8x8xf32> to vector<4x8x8xf32>
    %2 = arith.truncf %1 : vector<4x8x8xf32> to vector<4x8x8xbf16>
    %c0_3 = arith.constant 0 : index
    %c0_4 = arith.constant 0 : index
    %c0_5 = arith.constant 0 : index
    %c0_6 = arith.constant 0 : index
    %3 = vector.load %arg3[%c0_3, %c0_4, %c0_5, %c0_6] : memref<1x4x8x8xf32, #tpu.memory_space<vmem>>, vector<1x4x8x8xf32>
    %4 = vector.shape_cast %3 : vector<1x4x8x8xf32> to vector<4x8x8xf32>
    %5 = arith.truncf %4 : vector<4x8x8xf32> to vector<4x8x8xbf16>
    %c0_7 = arith.constant 0 : index
    %c0_8 = arith.constant 0 : index
    %c0_9 = arith.constant 0 : index
    %c0_10 = arith.constant 0 : index
    %6 = vector.load %arg4[%c0_7, %c0_8, %c0_9, %c0_10] : memref<1x4x8x8xf32, #tpu.memory_space<vmem>>, vector<1x4x8x8xf32>
    %7 = vector.shape_cast %6 : vector<1x4x8x8xf32> to vector<4x8x8xf32>
    %8 = arith.truncf %7 : vector<4x8x8xf32> to vector<4x8x8xbf16>
    "tpu.trace_start"() <{level = 10 : i32, message = "htd,hsd->hts"}> : () -> ()
    %cst = arith.constant dense<0.000000e+00> : vector<4x8x8xf32>
    %9 = tpu.matmul %2, %5, %cst {dimension_numbers = #tpu.dot_dimension_numbers<[2], [2], [1], [1], [0, 0, 0, 1, 1, 1], [0], [0]>} : vector<4x8x8xbf16>, vector<4x8x8xbf16>, vector<4x8x8xf32> -> vector<4x8x8xf32>
    "tpu.trace_stop"() : () -> ()
    %cst_11 = arith.constant 0.353553385 : f32
    %10 = vector.broadcast %cst_11 : f32 to vector<4x8x8xf32>
    %11 = arith.mulf %9, %10 : vector<4x8x8xf32>
    %12 = tpu.iota {dimensions = array<i32: 1>} : vector<1x8x8xi32>
    %13 = tpu.iota {dimensions = array<i32: 2>} : vector<1x8x8xi32>
    %14 = arith.cmpi sle, %13, %12 : vector<1x8x8xi32>
    %cst_12 = arith.constant -1.000000e+30 : f32
    %15 = vector.shape_cast %14 : vector<1x8x8xi1> to vector<1x8x8xi1>
    %16 = vector.broadcast %15 : vector<1x8x8xi1> to vector<4x8x8xi1>
    %17 = vector.broadcast %cst_12 : f32 to vector<4x8x8xf32>
    %18 = arith.select %16, %11, %17 : vector<4x8x8xi1>, vector<4x8x8xf32>
    %cst_13 = arith.constant dense<0xFF800000> : vector<4x8xf32>
    %19 = vector.multi_reduction <maximumf>, %18, %cst_13 [2] : vector<4x8x8xf32> to vector<4x8xf32>
    %20 = vector.shape_cast %19 : vector<4x8xf32> to vector<4x8x1xf32>
    %21 = vector.broadcast %20 : vector<4x8x1xf32> to vector<4x8x8xf32>
    %22 = arith.subf %18, %21 : vector<4x8x8xf32>
    %23 = math.exp %22 : vector<4x8x8xf32>
    %cst_14 = arith.constant dense<0.000000e+00> : vector<4x8xf32>
    %24 = vector.multi_reduction <add>, %23, %cst_14 [2] : vector<4x8x8xf32> to vector<4x8xf32>
    %25 = vector.shape_cast %24 : vector<4x8xf32> to vector<4x8x1xf32>
    %26 = arith.truncf %23 : vector<4x8x8xf32> to vector<4x8x8xbf16>
    "tpu.trace_start"() <{level = 10 : i32, message = "hts,hsd->htd"}> : () -> ()
    %cst_15 = arith.constant dense<0.000000e+00> : vector<4x8x8xf32>
    %27 = tpu.matmul %26, %8, %cst_15 {dimension_numbers = #tpu.dot_dimension_numbers<[2], [1], [1], [2], [0, 0, 0, 1, 1, 2], [0], [0]>} : vector<4x8x8xbf16>, vector<4x8x8xbf16>, vector<4x8x8xf32> -> vector<4x8x8xf32>
    "tpu.trace_stop"() : () -> ()
    %28 = tpu.reciprocal %25 {approx = true} : vector<4x8x1xf32> -> vector<4x8x1xf32>
    %29 = vector.broadcast %28 : vector<4x8x1xf32> to vector<4x8x8xf32>
    %30 = arith.mulf %27, %29 : vector<4x8x8xf32>
    %31 = arith.truncf %30 : vector<4x8x8xf32> to vector<4x8x8xbf16>
    %c0_16 = arith.constant 0 : index
    %c0_17 = arith.constant 0 : index
    %c0_18 = arith.constant 0 : index
    %32 = vector.load %arg5[%c0_16, %c0_17, %c0_18] : memref<4x8x32xbf16, #tpu.memory_space<vmem>>, vector<4x8x32xbf16>
    "tpu.trace_start"() <{level = 10 : i32, message = "htd,hdo->hto"}> : () -> ()
    %cst_19 = arith.constant dense<0.000000e+00> : vector<4x8x32xf32>
    %33 = tpu.matmul %31, %32, %cst_19 {dimension_numbers = #tpu.dot_dimension_numbers<[2], [1], [1], [2], [0, 0, 0, 1, 1, 2], [0], [0]>} : vector<4x8x8xbf16>, vector<4x8x32xbf16>, vector<4x8x32xf32> -> vector<4x8x32xf32>
    "tpu.trace_stop"() : () -> ()
    %cst_20 = arith.constant dense<0.000000e+00> : vector<8x32xf32>
    %34 = vector.multi_reduction <add>, %33, %cst_20 [0] : vector<4x8x32xf32> to vector<8x32xf32>
    %c0_21 = arith.constant 0 : index
    %c0_22 = arith.constant 0 : index
    %35 = vector.load %arg6[%c0_21, %c0_22] : memref<1x32xf32, #tpu.memory_space<vmem>>, vector<1x32xf32>
    %36 = vector.broadcast %35 : vector<1x32xf32> to vector<8x32xf32>
    %37 = arith.addf %34, %36 : vector<8x32xf32>
    %c0_23 = arith.constant 0 : index
    %c0_24 = arith.constant 0 : index
    %c0_25 = arith.constant 0 : index
    %38 = vector.load %arg1[%c0_23, %c0_24, %c0_25] : memref<1x8x32xf32, #tpu.memory_space<vmem>>, vector<1x8x32xf32>
    %39 = vector.shape_cast %38 : vector<1x8x32xf32> to vector<8x32xf32>
    %40 = arith.addf %39, %37 : vector<8x32xf32>
    %cst_26 = arith.constant dense<0.000000e+00> : vector<8xf32>
    %41 = vector.multi_reduction <add>, %40, %cst_26 [1] : vector<8x32xf32> to vector<8xf32>
    %42 = vector.shape_cast %41 : vector<8xf32> to vector<8x1xf32>
    %cst_27 = arith.constant 3.200000e+01 : f32
    %43 = vector.broadcast %cst_27 : f32 to vector<8x1xf32>
    %44 = arith.divf %42, %43 : vector<8x1xf32>
    %45 = vector.broadcast %44 : vector<8x1xf32> to vector<8x32xf32>
    %46 = arith.subf %40, %45 : vector<8x32xf32>
    %47 = arith.mulf %46, %46 : vector<8x32xf32>
    %cst_28 = arith.constant dense<0.000000e+00> : vector<8xf32>
    %48 = vector.multi_reduction <add>, %47, %cst_28 [1] : vector<8x32xf32> to vector<8xf32>
    %49 = vector.shape_cast %48 : vector<8xf32> to vector<8x1xf32>
    %cst_29 = arith.constant 3.200000e+01 : f32
    %50 = vector.broadcast %cst_29 : f32 to vector<8x1xf32>
    %51 = arith.divf %49, %50 : vector<8x1xf32>
    %cst_30 = arith.constant 9.99999974E-6 : f32
    %52 = vector.broadcast %cst_30 : f32 to vector<8x1xf32>
    %53 = arith.addf %51, %52 : vector<8x1xf32>
    %54 = math.rsqrt %53 : vector<8x1xf32>
    %55 = vector.broadcast %54 : vector<8x1xf32> to vector<8x32xf32>
    %56 = arith.mulf %46, %55 : vector<8x32xf32>
    %c0_31 = arith.constant 0 : index
    %c0_32 = arith.constant 0 : index
    %57 = vector.load %arg7[%c0_31, %c0_32] : memref<1x32xf32, #tpu.memory_space<vmem>>, vector<1x32xf32>
    %58 = vector.broadcast %57 : vector<1x32xf32> to vector<8x32xf32>
    %59 = arith.mulf %56, %58 : vector<8x32xf32>
    %c0_33 = arith.constant 0 : index
    %c0_34 = arith.constant 0 : index
    %60 = vector.load %arg8[%c0_33, %c0_34] : memref<1x32xf32, #tpu.memory_space<vmem>>, vector<1x32xf32>
    %61 = vector.broadcast %60 : vector<1x32xf32> to vector<8x32xf32>
    %62 = arith.addf %59, %61 : vector<8x32xf32>
    %c0_35 = arith.constant 0 : index
    %c0_36 = arith.constant 0 : index
    %c0_37 = arith.constant 0 : index
    %63 = vector.load %arg9[%c0_35, %c0_36, %c0_37] : memref<1x8x32xf32, #tpu.memory_space<vmem>>, vector<1x8x32xf32>
    %64 = vector.shape_cast %63 : vector<1x8x32xf32> to vector<8x32xf32>
    %65 = vector.shape_cast %62 : vector<8x32xf32> to vector<1x8x32xf32>
    tpu.vector_store %arg9[%c0_35, %c0_36, %c0_37], %65 {strides = array<i32>} : memref<1x8x32xf32, #tpu.memory_space<vmem>>, vector<1x8x32xf32>,
    return
  }
  func.func @transform_0(%arg0: i32) -> (i32, i32, i32) {
    %c0_i32 = arith.constant 0 : i32
    %c0_i32_0 = arith.constant 0 : i32
    %c0_i32_1 = arith.constant 0 : i32
    return %arg0, %c0_i32, %c0_i32_0 : i32, i32, i32
  }
  func.func @transform_1(%arg0: i32) -> (i32, i32, i32, i32) {
    %c0_i32 = arith.constant 0 : i32
    %c0_i32_0 = arith.constant 0 : i32
    %c0_i32_1 = arith.constant 0 : i32
    %c0_i32_2 = arith.constant 0 : i32
    return %arg0, %c0_i32, %c0_i32_0, %c0_i32_1 : i32, i32, i32, i32
  }
  func.func @transform_2(%arg0: i32) -> (i32, i32, i32, i32) {
    %c0_i32 = arith.constant 0 : i32
    %c0_i32_0 = arith.constant 0 : i32
    %c0_i32_1 = arith.constant 0 : i32
    %c0_i32_2 = arith.constant 0 : i32
    return %arg0, %c0_i32, %c0_i32_0, %c0_i32_1 : i32, i32, i32, i32
  }
  func.func @transform_3(%arg0: i32) -> (i32, i32, i32, i32) {
    %c0_i32 = arith.constant 0 : i32
    %c0_i32_0 = arith.constant 0 : i32
    %c0_i32_1 = arith.constant 0 : i32
    %c0_i32_2 = arith.constant 0 : i32
    return %arg0, %c0_i32, %c0_i32_0, %c0_i32_1 : i32, i32, i32, i32
  }
  func.func @transform_4(%arg0: i32) -> (i32, i32, i32) {
    %c0_i32 = arith.constant 0 : i32
    %c0_i32_0 = arith.constant 0 : i32
    %c0_i32_1 = arith.constant 0 : i32
    %c0_i32_2 = arith.constant 0 : i32
    return %c0_i32, %c0_i32_0, %c0_i32_1 : i32, i32, i32
  }
  func.func @transform_5(%arg0: i32) -> (i32, i32) {
    %c0_i32 = arith.constant 0 : i32
    %c0_i32_0 = arith.constant 0 : i32
    %c0_i32_1 = arith.constant 0 : i32
    return %c0_i32, %c0_i32_0 : i32, i32
  }
  func.func @transform_6(%arg0: i32) -> (i32, i32) {
    %c0_i32 = arith.constant 0 : i32
    %c0_i32_0 = arith.constant 0 : i32
    %c0_i32_1 = arith.constant 0 : i32
    return %c0_i32, %c0_i32_0 : i32, i32
  }
  func.func @transform_7(%arg0: i32) -> (i32, i32) {
    %c0_i32 = arith.constant 0 : i32
    %c0_i32_0 = arith.constant 0 : i32
    %c0_i32_1 = arith.constant 0 : i32
    return %c0_i32, %c0_i32_0 : i32, i32
  }
  func.func @transform_8(%arg0: i32) -> (i32, i32, i32) {
    %c0_i32 = arith.constant 0 : i32
    %c0_i32_0 = arith.constant 0 : i32
    %c0_i32_1 = arith.constant 0 : i32
    return %arg0, %c0_i32, %c0_i32_0 : i32, i32, i32
  }
}

module attributes {stable_mosaic.version = 11 : i64} {
  func.func @_ffn_add_ln_kernel(%arg0: i32, %arg1: memref<16x32xf32, #tpu.memory_space<vmem>>, %arg2: memref<32x64xbf16, #tpu.memory_space<vmem>>, %arg3: memref<1x64xf32, #tpu.memory_space<vmem>>, %arg4: memref<64x32xbf16, #tpu.memory_space<vmem>>, %arg5: memref<1x32xf32, #tpu.memory_space<vmem>>, %arg6: memref<1x32xf32, #tpu.memory_space<vmem>>, %arg7: memref<1x32xf32, #tpu.memory_space<vmem>>, %arg8: memref<16x32xf32, #tpu.memory_space<vmem>>) attributes {dimension_semantics = [#tpu.dimension_semantics<parallel>], iteration_bounds = array<i64: 1>, scalar_prefetch = 0 : i64, scratch_operands = 0 : i64, tpu.core_type = #tpu.core_type<tc>, window_params = [{transform_indices = @transform_0, window_bounds = array<i64: 16, 32>}, {pipeline_mode = #tpu.pipeline_mode<synchronous>, transform_indices = @transform_1, window_bounds = array<i64: 32, 64>}, {pipeline_mode = #tpu.pipeline_mode<synchronous>, transform_indices = @transform_2, window_bounds = array<i64: 1, 64>}, {pipeline_mode = #tpu.pipeline_mode<synchronous>, transform_indices = @transform_3, window_bounds = array<i64: 64, 32>}, {pipeline_mode = #tpu.pipeline_mode<synchronous>, transform_indices = @transform_4, window_bounds = array<i64: 1, 32>}, {pipeline_mode = #tpu.pipeline_mode<synchronous>, transform_indices = @transform_5, window_bounds = array<i64: 1, 32>}, {pipeline_mode = #tpu.pipeline_mode<synchronous>, transform_indices = @transform_6, window_bounds = array<i64: 1, 32>}, {transform_indices = @transform_7, window_bounds = array<i64: 16, 32>}]} {
    %c0 = arith.constant 0 : index
    %c0_0 = arith.constant 0 : index
    %0 = vector.load %arg1[%c0, %c0_0] : memref<16x32xf32, #tpu.memory_space<vmem>>, vector<16x32xf32>
    %1 = arith.truncf %0 : vector<16x32xf32> to vector<16x32xbf16>
    %c0_1 = arith.constant 0 : index
    %c0_2 = arith.constant 0 : index
    %2 = vector.load %arg2[%c0_1, %c0_2] : memref<32x64xbf16, #tpu.memory_space<vmem>>, vector<32x64xbf16>
    %cst = arith.constant dense<0.000000e+00> : vector<16x64xf32>
    %3 = tpu.matmul %1, %2, %cst {dimension_numbers = #tpu.dot_dimension_numbers<[1], [0], [0], [1], [0, 0, 1, 1], [], []>} : vector<16x32xbf16>, vector<32x64xbf16>, vector<16x64xf32> -> vector<16x64xf32>
    %c0_3 = arith.constant 0 : index
    %c0_4 = arith.constant 0 : index
    %4 = vector.load %arg3[%c0_3, %c0_4] : memref<1x64xf32, #tpu.memory_space<vmem>>, vector<1x64xf32>
    %5 = vector.broadcast %4 : vector<1x64xf32> to vector<16x64xf32>
    %6 = arith.addf %3, %5 : vector<16x64xf32>
    %cst_5 = arith.constant 0.000000e+00 : f32
    %7 = vector.broadcast %cst_5 : f32 to vector<16x64xf32>
    %8 = arith.maximumf %6, %7 : vector<16x64xf32>
    %9 = arith.truncf %8 : vector<16x64xf32> to vector<16x64xbf16>
    %c0_6 = arith.constant 0 : index
    %c0_7 = arith.constant 0 : index
    %10 = vector.load %arg4[%c0_6, %c0_7] : memref<64x32xbf16, #tpu.memory_space<vmem>>, vector<64x32xbf16>
    %cst_8 = arith.constant dense<0.000000e+00> : vector<16x32xf32>
    %11 = tpu.matmul %9, %10, %cst_8 {dimension_numbers = #tpu.dot_dimension_numbers<[1], [0], [0], [1], [0, 0, 1, 1], [], []>} : vector<16x64xbf16>, vector<64x32xbf16>, vector<16x32xf32> -> vector<16x32xf32>
    %c0_9 = arith.constant 0 : index
    %c0_10 = arith.constant 0 : index
    %12 = vector.load %arg5[%c0_9, %c0_10] : memref<1x32xf32, #tpu.memory_space<vmem>>, vector<1x32xf32>
    %13 = vector.broadcast %12 : vector<1x32xf32> to vector<16x32xf32>
    %14 = arith.addf %11, %13 : vector<16x32xf32>
    %15 = arith.addf %0, %14 : vector<16x32xf32>
    %cst_11 = arith.constant dense<0.000000e+00> : vector<16xf32>
    %16 = vector.multi_reduction <add>, %15, %cst_11 [1] : vector<16x32xf32> to vector<16xf32>
    %17 = vector.shape_cast %16 : vector<16xf32> to vector<16x1xf32>
    %cst_12 = arith.constant 3.200000e+01 : f32
    %18 = vector.broadcast %cst_12 : f32 to vector<16x1xf32>
    %19 = arith.divf %17, %18 : vector<16x1xf32>
    %20 = vector.broadcast %19 : vector<16x1xf32> to vector<16x32xf32>
    %21 = arith.subf %15, %20 : vector<16x32xf32>
    %22 = arith.mulf %21, %21 : vector<16x32xf32>
    %cst_13 = arith.constant dense<0.000000e+00> : vector<16xf32>
    %23 = vector.multi_reduction <add>, %22, %cst_13 [1] : vector<16x32xf32> to vector<16xf32>
    %24 = vector.shape_cast %23 : vector<16xf32> to vector<16x1xf32>
    %cst_14 = arith.constant 3.200000e+01 : f32
    %25 = vector.broadcast %cst_14 : f32 to vector<16x1xf32>
    %26 = arith.divf %24, %25 : vector<16x1xf32>
    %cst_15 = arith.constant 9.99999974E-6 : f32
    %27 = vector.broadcast %cst_15 : f32 to vector<16x1xf32>
    %28 = arith.addf %26, %27 : vector<16x1xf32>
    %29 = math.rsqrt %28 : vector<16x1xf32>
    %30 = vector.broadcast %29 : vector<16x1xf32> to vector<16x32xf32>
    %31 = arith.mulf %21, %30 : vector<16x32xf32>
    %c0_16 = arith.constant 0 : index
    %c0_17 = arith.constant 0 : index
    %32 = vector.load %arg6[%c0_16, %c0_17] : memref<1x32xf32, #tpu.memory_space<vmem>>, vector<1x32xf32>
    %33 = vector.broadcast %32 : vector<1x32xf32> to vector<16x32xf32>
    %34 = arith.mulf %31, %33 : vector<16x32xf32>
    %c0_18 = arith.constant 0 : index
    %c0_19 = arith.constant 0 : index
    %35 = vector.load %arg7[%c0_18, %c0_19] : memref<1x32xf32, #tpu.memory_space<vmem>>, vector<1x32xf32>
    %36 = vector.broadcast %35 : vector<1x32xf32> to vector<16x32xf32>
    %37 = arith.addf %34, %36 : vector<16x32xf32>
    %c0_20 = arith.constant 0 : index
    %c0_21 = arith.constant 0 : index
    %38 = vector.load %arg8[%c0_20, %c0_21] : memref<16x32xf32, #tpu.memory_space<vmem>>, vector<16x32xf32>
    tpu.vector_store %arg8[%c0_20, %c0_21], %37 {strides = array<i32>} : memref<16x32xf32, #tpu.memory_space<vmem>>, vector<16x32xf32>,
    return
  }
  func.func @transform_0(%arg0: i32) -> (i32, i32) {
    %c0_i32 = arith.constant 0 : i32
    %c0_i32_0 = arith.constant 0 : i32
    return %arg0, %c0_i32 : i32, i32
  }
  func.func @transform_1(%arg0: i32) -> (i32, i32) {
    %c0_i32 = arith.constant 0 : i32
    %c0_i32_0 = arith.constant 0 : i32
    %c0_i32_1 = arith.constant 0 : i32
    return %c0_i32, %c0_i32_0 : i32, i32
  }
  func.func @transform_2(%arg0: i32) -> (i32, i32) {
    %c0_i32 = arith.constant 0 : i32
    %c0_i32_0 = arith.constant 0 : i32
    %c0_i32_1 = arith.constant 0 : i32
    return %c0_i32, %c0_i32_0 : i32, i32
  }
  func.func @transform_3(%arg0: i32) -> (i32, i32) {
    %c0_i32 = arith.constant 0 : i32
    %c0_i32_0 = arith.constant 0 : i32
    %c0_i32_1 = arith.constant 0 : i32
    return %c0_i32, %c0_i32_0 : i32, i32
  }
  func.func @transform_4(%arg0: i32) -> (i32, i32) {
    %c0_i32 = arith.constant 0 : i32
    %c0_i32_0 = arith.constant 0 : i32
    %c0_i32_1 = arith.constant 0 : i32
    return %c0_i32, %c0_i32_0 : i32, i32
  }
  func.func @transform_5(%arg0: i32) -> (i32, i32) {
    %c0_i32 = arith.constant 0 : i32
    %c0_i32_0 = arith.constant 0 : i32
    %c0_i32_1 = arith.constant 0 : i32
    return %c0_i32, %c0_i32_0 : i32, i32
  }
  func.func @transform_6(%arg0: i32) -> (i32, i32) {
    %c0_i32 = arith.constant 0 : i32
    %c0_i32_0 = arith.constant 0 : i32
    %c0_i32_1 = arith.constant 0 : i32
    return %c0_i32, %c0_i32_0 : i32, i32
  }
  func.func @transform_7(%arg0: i32) -> (i32, i32) {
    %c0_i32 = arith.constant 0 : i32
    %c0_i32_0 = arith.constant 0 : i32
    return %arg0, %c0_i32 : i32, i32
  }
}

module attributes {stable_mosaic.version = 11 : i64} {
  func.func @_ln_linear_kernel(%arg0: i32, %arg1: i32, %arg2: memref<16x32xf32, #tpu.memory_space<vmem>>, %arg3: memref<1x32xf32, #tpu.memory_space<vmem>>, %arg4: memref<1x32xf32, #tpu.memory_space<vmem>>, %arg5: memref<32x64xbf16, #tpu.memory_space<vmem>>, %arg6: memref<1x64xf32, #tpu.memory_space<vmem>>, %arg7: memref<16x64xf32, #tpu.memory_space<vmem>>) attributes {dimension_semantics = [#tpu.dimension_semantics<parallel>, #tpu.dimension_semantics<parallel>], iteration_bounds = array<i64: 1, 1>, scalar_prefetch = 0 : i64, scratch_operands = 0 : i64, tpu.core_type = #tpu.core_type<tc>, window_params = [{transform_indices = @transform_0, window_bounds = array<i64: 16, 32>}, {pipeline_mode = #tpu.pipeline_mode<synchronous>, transform_indices = @transform_1, window_bounds = array<i64: 1, 32>}, {pipeline_mode = #tpu.pipeline_mode<synchronous>, transform_indices = @transform_2, window_bounds = array<i64: 1, 32>}, {transform_indices = @transform_3, window_bounds = array<i64: 32, 64>}, {transform_indices = @transform_4, window_bounds = array<i64: 1, 64>}, {transform_indices = @transform_5, window_bounds = array<i64: 16, 64>}]} {
    %c0 = arith.constant 0 : index
    %c0_0 = arith.constant 0 : index
    %0 = vector.load %arg2[%c0, %c0_0] : memref<16x32xf32, #tpu.memory_space<vmem>>, vector<16x32xf32>
    %cst = arith.constant dense<0.000000e+00> : vector<16xf32>
    %1 = vector.multi_reduction <add>, %0, %cst [1] : vector<16x32xf32> to vector<16xf32>
    %2 = vector.shape_cast %1 : vector<16xf32> to vector<16x1xf32>
    %cst_1 = arith.constant 3.200000e+01 : f32
    %3 = vector.broadcast %cst_1 : f32 to vector<16x1xf32>
    %4 = arith.divf %2, %3 : vector<16x1xf32>
    %5 = vector.broadcast %4 : vector<16x1xf32> to vector<16x32xf32>
    %6 = arith.subf %0, %5 : vector<16x32xf32>
    %7 = arith.mulf %6, %6 : vector<16x32xf32>
    %cst_2 = arith.constant dense<0.000000e+00> : vector<16xf32>
    %8 = vector.multi_reduction <add>, %7, %cst_2 [1] : vector<16x32xf32> to vector<16xf32>
    %9 = vector.shape_cast %8 : vector<16xf32> to vector<16x1xf32>
    %cst_3 = arith.constant 3.200000e+01 : f32
    %10 = vector.broadcast %cst_3 : f32 to vector<16x1xf32>
    %11 = arith.divf %9, %10 : vector<16x1xf32>
    %cst_4 = arith.constant 9.99999974E-6 : f32
    %12 = vector.broadcast %cst_4 : f32 to vector<16x1xf32>
    %13 = arith.addf %11, %12 : vector<16x1xf32>
    %14 = math.rsqrt %13 : vector<16x1xf32>
    %15 = vector.broadcast %14 : vector<16x1xf32> to vector<16x32xf32>
    %16 = arith.mulf %6, %15 : vector<16x32xf32>
    %c0_5 = arith.constant 0 : index
    %c0_6 = arith.constant 0 : index
    %17 = vector.load %arg3[%c0_5, %c0_6] : memref<1x32xf32, #tpu.memory_space<vmem>>, vector<1x32xf32>
    %18 = vector.broadcast %17 : vector<1x32xf32> to vector<16x32xf32>
    %19 = arith.mulf %16, %18 : vector<16x32xf32>
    %c0_7 = arith.constant 0 : index
    %c0_8 = arith.constant 0 : index
    %20 = vector.load %arg4[%c0_7, %c0_8] : memref<1x32xf32, #tpu.memory_space<vmem>>, vector<1x32xf32>
    %21 = vector.broadcast %20 : vector<1x32xf32> to vector<16x32xf32>
    %22 = arith.addf %19, %21 : vector<16x32xf32>
    %23 = arith.truncf %22 : vector<16x32xf32> to vector<16x32xbf16>
    %c0_9 = arith.constant 0 : index
    %c0_10 = arith.constant 0 : index
    %24 = vector.load %arg5[%c0_9, %c0_10] : memref<32x64xbf16, #tpu.memory_space<vmem>>, vector<32x64xbf16>
    %cst_11 = arith.constant dense<0.000000e+00> : vector<16x64xf32>
    %25 = tpu.matmul %23, %24, %cst_11 {dimension_numbers = #tpu.dot_dimension_numbers<[1], [0], [0], [1], [0, 0, 1, 1], [], []>} : vector<16x32xbf16>, vector<32x64xbf16>, vector<16x64xf32> -> vector<16x64xf32>
    %c0_12 = arith.constant 0 : index
    %c0_13 = arith.constant 0 : index
    %26 = vector.load %arg6[%c0_12, %c0_13] : memref<1x64xf32, #tpu.memory_space<vmem>>, vector<1x64xf32>
    %27 = vector.broadcast %26 : vector<1x64xf32> to vector<16x64xf32>
    %28 = arith.addf %25, %27 : vector<16x64xf32>
    %c0_14 = arith.constant 0 : index
    %c0_15 = arith.constant 0 : index
    %29 = vector.load %arg7[%c0_14, %c0_15] : memref<16x64xf32, #tpu.memory_space<vmem>>, vector<16x64xf32>
    tpu.vector_store %arg7[%c0_14, %c0_15], %28 {strides = array<i32>} : memref<16x64xf32, #tpu.memory_space<vmem>>, vector<16x64xf32>,
    return
  }
  func.func @transform_0(%arg0: i32, %arg1: i32) -> (i32, i32) {
    %c0_i32 = arith.constant 0 : i32
    %c0_i32_0 = arith.constant 0 : i32
    return %arg0, %c0_i32 : i32, i32
  }
  func.func @transform_1(%arg0: i32, %arg1: i32) -> (i32, i32) {
    %c0_i32 = arith.constant 0 : i32
    %c0_i32_0 = arith.constant 0 : i32
    %c0_i32_1 = arith.constant 0 : i32
    return %c0_i32, %c0_i32_0 : i32, i32
  }
  func.func @transform_2(%arg0: i32, %arg1: i32) -> (i32, i32) {
    %c0_i32 = arith.constant 0 : i32
    %c0_i32_0 = arith.constant 0 : i32
    %c0_i32_1 = arith.constant 0 : i32
    return %c0_i32, %c0_i32_0 : i32, i32
  }
  func.func @transform_3(%arg0: i32, %arg1: i32) -> (i32, i32) {
    %c0_i32 = arith.constant 0 : i32
    %c0_i32_0 = arith.constant 0 : i32
    return %c0_i32, %arg1 : i32, i32
  }
  func.func @transform_4(%arg0: i32, %arg1: i32) -> (i32, i32) {
    %c0_i32 = arith.constant 0 : i32
    %c0_i32_0 = arith.constant 0 : i32
    return %c0_i32, %arg1 : i32, i32
  }
  func.func @transform_5(%arg0: i32, %arg1: i32) -> (i32, i32) {
    %c0_i32 = arith.constant 0 : i32
    return %arg0, %arg1 : i32, i32
  }
}

</mosaic_0001>

<llo_original>
// kernel: gpt_forward.7
$region0: #{gpt_forward.7}
  #allocation0 [shape = 'u32[]', space=smem, size = 0x4, offset = 0x4, fixed_abs, tag = 'smem constant byte address 0x4 - core index']
  #allocation1 [shape = 'u32[144,128]{1,0:T(1,128)}', space=vmem, size = 0x12000, scoped, tag = 'internal scratch']
  %s0 = inlined_call_operand.vmem [shape: f32[16,32], index: 0, kind: input, shape index: {}]
  %s1 = inlined_call_operand.vmem [shape: bf16[32,96], index: 1, kind: input, shape index: {}]
  %s2 = inlined_call_operand.vmem [shape: f32[1,96], index: 2, kind: input, shape index: {}]
  %s3 = inlined_call_operand.vmem [shape: f32[16,96], index: 3, kind: output, shape index: {}]
  %s4 = sld [smem:[#allocation0]]
  $region22: #{gpt_forward.7} parent=0
    _
  %s6 = ssub.s32 1, %s4
  %s7 = scalar_select 0, %s6, %s4
  // Predicated region
  $region2: #{gpt_forward.7} parent=0 // pred_check
    _
  $region3: #{gpt_forward.7} parent=0 // pred_check_branch
    %9 = sbr.rel (0) target = $region5
  $region4: #{gpt_forward.7} parent=0 // pred_region
    _
  $region5: #{gpt_forward.7} parent=0 // pred_fallthru
    _
  // Predicated region
  $region6: #{gpt_forward.7} parent=0 // pred_check
    _
  $region7: #{gpt_forward.7} parent=0 // pred_check_branch
    %11 = sbr.rel (0) target = $region9
  $region8: #{gpt_forward.7} parent=0 // pred_region
    _
  $region9: #{gpt_forward.7} parent=0 // pred_fallthru
    _
  // Predicated region
  $region10: #{gpt_forward.7} parent=0 // pred_check
    _
  $region11: #{gpt_forward.7} parent=0 // pred_check_branch
    %13 = sbr.rel (0) target = $region13
  $region12: #{gpt_forward.7} parent=0 // pred_region
    _
  $region13: #{gpt_forward.7} parent=0 // pred_fallthru
    _
  %v15 = vld [vmem:[%s0] sm:$0xff]
  %v16 = vld [vmem:[%s0 + $0x8] sm:$0xff]
  %v17 = vpack.c.bf16 %v16, %v15
  %v18 = vld [vmem:[%s1] sm:$0xf]
  %v19 = vld [vmem:[%s1 + $0x4] sm:$0xf]
  %v20 = vld [vmem:[%s1 + $0x8] sm:$0xf]
  %v21 = vld [vmem:[%s1 + $0xc] sm:$0xf]
  %v22 = vld [vmem:[%s2] sm:$0x1]
  %v24 = vlaneseq
  %v25 = vshrl.u32 %v24, 7
  %v26 = vsub.s32 0, %v25
  %v27 = vrot.slane %v22, %v26
  %v33 = vunpack.c.l.b16 %v18
  %v34 = vunpack.c.l.b16 %v19
  %v35 = vunpack.c.l.b16 %v20
  %v36 = vunpack.c.l.b16 %v21
  %v37 = vpack.c.b16 %v34, %v33
  %v38 = vpack.c.b16 %v36, %v35
  %vm41 = vcmask 261120
  %v43 = vsel %vm41, %v17, 0
  %45 = vmatprep.subr.bf16.mxu0 0
  %46 = vmatpush1.bf16.msra.mxu0 %v37
  %47 = vmatprep.subr.bf16.mxu0 0
  %48 = vmatpush1.bf16.msra.mxu0 %v38
  %49 = vmatprep.subr.bf16.mxu0 0
  %50 = vmatpush1.bf16.msra.mxu0 0
  %51 = vmatprep.subr.bf16.mxu0 0
  %52 = vmatpush1.bf16.msra.mxu0 0
  %53 = vmatprep.subr.bf16.mxu0 0
  %54 = vmatpush1.bf16.msra.mxu0 0
  %55 = vmatprep.subr.bf16.mxu0 0
  %56 = vmatpush1.bf16.msra.mxu0 0
  %57 = vmatprep.subr.bf16.mxu0 0
  %58 = vmatpush1.bf16.msra.mxu0 0
  %59 = vmatprep.subr.bf16.mxu0 0
  %60 = vmatpush1.bf16.msra.mxu0 0
  %61 = vmatprep.subr.bf16.mxu0 0
  %62 = vmatpush1.bf16.msra.mxu0 0
  %63 = vmatprep.subr.bf16.mxu0 0
  %64 = vmatpush1.bf16.msra.mxu0 0
  %65 = vmatprep.subr.bf16.mxu0 0
  %66 = vmatpush1.bf16.msra.mxu0 0
  %67 = vmatprep.subr.bf16.mxu0 0
  %68 = vmatpush1.bf16.msra.mxu0 0
  %69 = vmatprep.subr.bf16.mxu0 0
  %70 = vmatpush1.bf16.msra.mxu0 0
  %71 = vmatprep.subr.bf16.mxu0 0
  %72 = vmatpush1.bf16.msra.mxu0 0
  %73 = vmatprep.subr.bf16.mxu0 0
  %74 = vmatpush1.bf16.msra.mxu0 0
  %75 = vmatprep.subr.bf16.mxu0 0
  %76 = vmatpush1.bf16.msra.mxu0 0
  %77 = vmatprep.mubr.bf16.mxu0 0
  %78 = vmatmul.mubr.bf16.gmra.mrb[0].mxu0 %v43
  %v79 = vpop.f32.mrb[0].mxu0
  %v80 = vadd.f32 %v27, %v79
  %v81 = vpop.f32.mrb[0].mxu0
  %v82 = vpop.f32.mrb[0].mxu0
  %v83 = vadd.f32 %v27, %v82
  %v84 = vpop.f32.mrb[0].mxu0
  %85 = vdwg.mxu0
  %vm86 = vcmask 785408
  %87 = vst.msk [vmem:[%s3] sm:$0xff] %vm86, %v80
  %88 = vst.msk [vmem:[%s3 + $0x8] sm:$0xff] %vm86, %v83
  // Predicated region
  $region14: #{gpt_forward.7} parent=0 // pred_check
    _
  $region15: #{gpt_forward.7} parent=0 // pred_check_branch
    %90 = sbr.rel (0) target = $region17
  $region16: #{gpt_forward.7} parent=0 // pred_region
    _
  $region17: #{gpt_forward.7} parent=0 // pred_fallthru
    _
  // Predicated region
  $region18: #{gpt_forward.7} parent=0 // pred_check
    _
  $region19: #{gpt_forward.7} parent=0 // pred_check_branch
    %92 = sbr.rel (0) target = $region21
  $region20: #{gpt_forward.7} parent=0 // pred_region
    _
  $region21: #{gpt_forward.7} parent=0 // pred_fallthru
    _

// kernel: gpt_forward.9
$region0: #{gpt_forward.9}
  #allocation0 [shape = 'u32[]', space=smem, size = 0x4, offset = 0x4, fixed_abs, tag = 'smem constant byte address 0x4 - core index']
  #allocation1 [shape = 'u32[144,128]{1,0:T(1,128)}', space=vmem, size = 0x12000, scoped, tag = 'internal scratch']
  %s0 = inlined_call_operand.vmem [shape: f32[16,32], index: 0, kind: input, shape index: {}]
  %s1 = inlined_call_operand.vmem [shape: bf16[32,64], index: 1, kind: input, shape index: {}]
  %s2 = inlined_call_operand.vmem [shape: f32[1,64], index: 2, kind: input, shape index: {}]
  %s3 = inlined_call_operand.vmem [shape: bf16[64,32], index: 3, kind: input, shape index: {}]
  %s4 = inlined_call_operand.vmem [shape: f32[1,32], index: 4, kind: input, shape index: {}]
  %s5 = inlined_call_operand.vmem [shape: f32[1,32], index: 5, kind: input, shape index: {}]
  %s6 = inlined_call_operand.vmem [shape: f32[1,32], index: 6, kind: input, shape index: {}]
  %s7 = inlined_call_operand.vmem [shape: f32[16,32], index: 7, kind: output, shape index: {}]
  %s8 = sld [smem:[#allocation0]]
  $region38: #{gpt_forward.9} parent=0
    _
  %s10 = ssub.s32 1, %s8
  %s11 = scalar_select 0, %s10, %s8
  // Predicated region
  $region2: #{gpt_forward.9} parent=0 // pred_check
    _
  $region3: #{gpt_forward.9} parent=0 // pred_check_branch
    %13 = sbr.rel (0) target = $region5
  $region4: #{gpt_forward.9} parent=0 // pred_region
    _
  $region5: #{gpt_forward.9} parent=0 // pred_fallthru
    _
  // Predicated region
  $region6: #{gpt_forward.9} parent=0 // pred_check
    _
  $region7: #{gpt_forward.9} parent=0 // pred_check_branch
    %15 = sbr.rel (0) target = $region9
  $region8: #{gpt_forward.9} parent=0 // pred_region
    _
  $region9: #{gpt_forward.9} parent=0 // pred_fallthru
    _
  // Predicated region
  $region10: #{gpt_forward.9} parent=0 // pred_check
    _
  $region11: #{gpt_forward.9} parent=0 // pred_check_branch
    %17 = sbr.rel (0) target = $region13
  $region12: #{gpt_forward.9} parent=0 // pred_region
    _
  $region13: #{gpt_forward.9} parent=0 // pred_fallthru
    _
  // Predicated region
  $region14: #{gpt_forward.9} parent=0 // pred_check
    _
  $region15: #{gpt_forward.9} parent=0 // pred_check_branch
    %19 = sbr.rel (0) target = $region17
  $region16: #{gpt_forward.9} parent=0 // pred_region
    _
  $region17: #{gpt_forward.9} parent=0 // pred_fallthru
    _
  // Predicated region
  $region18: #{gpt_forward.9} parent=0 // pred_check
    _
  $region19: #{gpt_forward.9} parent=0 // pred_check_branch
    %21 = sbr.rel (0) target = $region21
  $region20: #{gpt_forward.9} parent=0 // pred_region
    _
  $region21: #{gpt_forward.9} parent=0 // pred_fallthru
    _
  // Predicated region
  $region22: #{gpt_forward.9} parent=0 // pred_check
    _
  $region23: #{gpt_forward.9} parent=0 // pred_check_branch
    %23 = sbr.rel (0) target = $region25
  $region24: #{gpt_forward.9} parent=0 // pred_region
    _
  $region25: #{gpt_forward.9} parent=0 // pred_fallthru
    _
  // Predicated region
  $region26: #{gpt_forward.9} parent=0 // pred_check
    _
  $region27: #{gpt_forward.9} parent=0 // pred_check_branch
    %25 = sbr.rel (0) target = $region29
  $region28: #{gpt_forward.9} parent=0 // pred_region
    _
  $region29: #{gpt_forward.9} parent=0 // pred_fallthru
    _
  %v27 = vld [vmem:[%s0] sm:$0xff]
  %v28 = vld [vmem:[%s0 + $0x8] sm:$0xff]
  %v29 = vpack.c.bf16 %v28, %v27
  %v30 = vld [vmem:[%s1] sm:$0xf]
  %v31 = vld [vmem:[%s1 + $0x4] sm:$0xf]
  %v32 = vld [vmem:[%s1 + $0x8] sm:$0xf]
  %v33 = vld [vmem:[%s1 + $0xc] sm:$0xf]
  %v34 = vld [vmem:[%s2] sm:$0x1]
  %v36 = vlaneseq
  %v37 = vshrl.u32 %v36, 7
  %v38 = vsub.s32 0, %v37
  %v39 = vrot.slane %v34, %v38
  %v45 = vunpack.c.l.b16 %v30
  %v46 = vunpack.c.l.b16 %v31
  %v47 = vunpack.c.l.b16 %v32
  %v48 = vunpack.c.l.b16 %v33
  %v49 = vpack.c.b16 %v46, %v45
  %v50 = vpack.c.b16 %v48, %v47
  %vm53 = vcmask 261120
  %v55 = vsel %vm53, %v29, 0
  %57 = vmatprep.subr.bf16.mxu0 0
  %58 = vmatpush1.bf16.msra.mxu0 %v49
  %59 = vmatprep.subr.bf16.mxu0 0
  %60 = vmatpush1.bf16.msra.mxu0 %v50
  %61 = vmatprep.subr.bf16.mxu0 0
  %62 = vmatpush1.bf16.msra.mxu0 0
  %63 = vmatprep.subr.bf16.mxu0 0
  %64 = vmatpush1.bf16.msra.mxu0 0
  %65 = vmatprep.subr.bf16.mxu0 0
  %66 = vmatpush1.bf16.msra.mxu0 0
  %67 = vmatprep.subr.bf16.mxu0 0
  %68 = vmatpush1.bf16.msra.mxu0 0
  %69 = vmatprep.subr.bf16.mxu0 0
  %70 = vmatpush1.bf16.msra.mxu0 0
  %71 = vmatprep.subr.bf16.mxu0 0
  %72 = vmatpush1.bf16.msra.mxu0 0
  %73 = vmatprep.subr.bf16.mxu0 0
  %74 = vmatpush1.bf16.msra.mxu0 0
  %75 = vmatprep.subr.bf16.mxu0 0
  %76 = vmatpush1.bf16.msra.mxu0 0
  %77 = vmatprep.subr.bf16.mxu0 0
  %78 = vmatpush1.bf16.msra.mxu0 0
  %79 = vmatprep.subr.bf16.mxu0 0
  %80 = vmatpush1.bf16.msra.mxu0 0
  %81 = vmatprep.subr.bf16.mxu0 0
  %82 = vmatpush1.bf16.msra.mxu0 0
  %83 = vmatprep.subr.bf16.mxu0 0
  %84 = vmatpush1.bf16.msra.mxu0 0
  %85 = vmatprep.subr.bf16.mxu0 0
  %86 = vmatpush1.bf16.msra.mxu0 0
  %87 = vmatprep.subr.bf16.mxu0 0
  %88 = vmatpush1.bf16.msra.mxu0 0
  %89 = vmatprep.mubr.bf16.mxu0 0
  %90 = vmatmul.mubr.bf16.gmra.mrb[0].mxu0 %v55
  %v91 = vpop.f32.mrb[0].mxu0
  %v92 = vadd.f32 %v39, %v91
  %v93 = vpop.f32.mrb[0].mxu0
  %v94 = vpop.f32.mrb[0].mxu0
  %v95 = vadd.f32 %v39, %v94
  %v96 = vpop.f32.mrb[0].mxu0
  %97 = vdwg.mxu0
  %v98 = vmax.f32 %v92, 0.0
  %v99 = vmax.f32 %v95, 0.0
  %v100 = vpack.c.bf16 %v99, %v98
  %v101 = vld [vmem:[%s3] sm:$0xf]
  %v102 = vld [vmem:[%s3 + $0x4] sm:$0xf]
  %v103 = vld [vmem:[%s3 + $0x8] sm:$0xf]
  %v104 = vld [vmem:[%s3 + $0xc] sm:$0xf]
  %v105 = vld [vmem:[%s3 + $0x10] sm:$0xf]
  %v106 = vld [vmem:[%s3 + $0x14] sm:$0xf]
  %v107 = vld [vmem:[%s3 + $0x18] sm:$0xf]
  %v108 = vld [vmem:[%s3 + $0x1c] sm:$0xf]
  %v109 = vld [vmem:[%s4] sm:$0x1]
  %v111 = vlaneseq
  %v112 = vshrl.u32 %v111, 7
  %v113 = vsub.s32 0, %v112
  %v114 = vrot.slane %v109, %v113
  %v124 = vunpack.c.l.b16 %v101
  %v125 = vunpack.c.l.b16 %v102
  %v126 = vunpack.c.l.b16 %v103
  %v127 = vunpack.c.l.b16 %v104
  %v128 = vunpack.c.l.b16 %v105
  %v129 = vunpack.c.l.b16 %v106
  %v130 = vunpack.c.l.b16 %v107
  %v131 = vunpack.c.l.b16 %v108
  %v132 = vpack.c.b16 %v125, %v124
  %v133 = vpack.c.b16 %v127, %v126
  %v134 = vpack.c.b16 %v129, %v128
  %v135 = vpack.c.b16 %v131, %v130
  %vm140 = vcmask 523264
  %v142 = vsel %vm140, %v100, 0
  %144 = vmatprep.subr.bf16.mxu0 0
  %145 = vmatpush1.bf16.msra.mxu0 %v132
  %146 = vmatprep.subr.bf16.mxu0 0
  %147 = vmatpush1.bf16.msra.mxu0 %v133
  %148 = vmatprep.subr.bf16.mxu0 0
  %149 = vmatpush1.bf16.msra.mxu0 %v134
  %150 = vmatprep.subr.bf16.mxu0 0
  %151 = vmatpush1.bf16.msra.mxu0 %v135
  %152 = vmatprep.subr.bf16.mxu0 0
  %153 = vmatpush1.bf16.msra.mxu0 0
  %154 = vmatprep.subr.bf16.mxu0 0
  %155 = vmatpush1.bf16.msra.mxu0 0
  %156 = vmatprep.subr.bf16.mxu0 0
  %157 = vmatpush1.bf16.msra.mxu0 0
  %158 = vmatprep.subr.bf16.mxu0 0
  %159 = vmatpush1.bf16.msra.mxu0 0
  %160 = vmatprep.subr.bf16.mxu0 0
  %161 = vmatpush1.bf16.msra.mxu0 0
  %162 = vmatprep.subr.bf16.mxu0 0
  %163 = vmatpush1.bf16.msra.mxu0 0
  %164 = vmatprep.subr.bf16.mxu0 0
  %165 = vmatpush1.bf16.msra.mxu0 0
  %166 = vmatprep.subr.bf16.mxu0 0
  %167 = vmatpush1.bf16.msra.mxu0 0
  %168 = vmatprep.subr.bf16.mxu0 0
  %169 = vmatpush1.bf16.msra.mxu0 0
  %170 = vmatprep.subr.bf16.mxu0 0
  %171 = vmatpush1.bf16.msra.mxu0 0
  %172 = vmatprep.subr.bf16.mxu0 0
  %173 = vmatpush1.bf16.msra.mxu0 0
  %174 = vmatprep.subr.bf16.mxu0 0
  %175 = vmatpush1.bf16.msra.mxu0 0
  %176 = vmatprep.mubr.bf16.mxu0 0
  %177 = vmatmul.mubr.bf16.gmra.mrb[0].mxu0 %v142
  %v178 = vpop.f32.mrb[0].mxu0
  %v179 = vadd.f32 %v114, %v178
  %v180 = vpop.f32.mrb[0].mxu0
  %v181 = vpop.f32.mrb[0].mxu0
  %v182 = vadd.f32 %v114, %v181
  %v183 = vpop.f32.mrb[0].mxu0
  %184 = vdwg.mxu0
  %v185 = vadd.f32 %v27, %v179
  %v186 = vadd.f32 %v28, %v182
  %v187 = vsel %vm53, %v185, 0.0
  %188 = vadd.xlane.f32.xlu0 %v187
  %v189 = vpop.xlane.xlu0 %188
  %v190 = vsel %vm53, %v186, 0.0
  %191 = vadd.xlane.f32.xlu0 %v190
  %v192 = vpop.xlane.xlu0 %191
  %v193 = vrcp.pop 32.0
  %v194 = vmul.f32 %v189, %v193
  %v195 = vmul.f32 %v192, %v193
  %v196 = vsub.f32 %v185, %v194
  %v197 = vsub.f32 %v186, %v195
  %v198 = vmul.f32 %v196, %v196
  %v199 = vmul.f32 %v197, %v197
  %v200 = vsel %vm53, %v198, 0.0
  %201 = vadd.xlane.f32.xlu0 %v200
  %v202 = vpop.xlane.xlu0 %201
  %v203 = vsel %vm53, %v199, 0.0
  %204 = vadd.xlane.f32.xlu0 %v203
  %v205 = vpop.xlane.xlu0 %204
  %v206 = vmul.f32 %v202, %v193
  %v207 = vmul.f32 %v205, %v193
  %v208 = vadd.f32 %v206, 1e-05
  %v209 = vadd.f32 %v207, 1e-05
  %v210 = vrsqrt.pop %v208
  %v211 = vrsqrt.pop %v209
  %v212 = vmul.f32 %v196, %v210
  %v213 = vmul.f32 %v197, %v211
  %v214 = vld [vmem:[%s5] sm:$0x1]
  %v216 = vlaneseq
  %v217 = vshrl.u32 %v216, 7
  %v218 = vsub.s32 0, %v217
  %v219 = vrot.slane %v214, %v218
  %v221 = vmul.f32 %v212, %v219
  %v222 = vmul.f32 %v213, %v219
  %v223 = vld [vmem:[%s6] sm:$0x1]
  %v225 = vlaneseq
  %v226 = vshrl.u32 %v225, 7
  %v227 = vsub.s32 0, %v226
  %v228 = vrot.slane %v223, %v227
  %v230 = vadd.f32 %v221, %v228
  %v231 = vadd.f32 %v222, %v228
  %232 = vst.msk [vmem:[%s7] sm:$0xff] %vm53, %v230
  %233 = vst.msk [vmem:[%s7 + $0x8] sm:$0xff] %vm53, %v231
  // Predicated region
  $region30: #{gpt_forward.9} parent=0 // pred_check
    _
  $region31: #{gpt_forward.9} parent=0 // pred_check_branch
    %235 = sbr.rel (0) target = $region33
  $region32: #{gpt_forward.9} parent=0 // pred_region
    _
  $region33: #{gpt_forward.9} parent=0 // pred_fallthru
    _
  // Predicated region
  $region34: #{gpt_forward.9} parent=0 // pred_check
    _
  $region35: #{gpt_forward.9} parent=0 // pred_check_branch
    %237 = sbr.rel (0) target = $region37
  $region36: #{gpt_forward.9} parent=0 // pred_region
    _
  $region37: #{gpt_forward.9} parent=0 // pred_fallthru
    _

// kernel: gpt_forward.13
$region0: #{gpt_forward.13}
  #allocation0 [shape = 'u32[]', space=smem, size = 0x4, offset = 0x4, fixed_abs, tag = 'smem constant byte address 0x4 - core index']
  #allocation1 [shape = 'u32[144,128]{1,0:T(1,128)}', space=vmem, size = 0x12000, scoped, tag = 'internal scratch']
  %s0 = inlined_call_operand.vmem [shape: f32[16,32], index: 0, kind: input, shape index: {}]
  %s1 = inlined_call_operand.vmem [shape: f32[1,32], index: 1, kind: input, shape index: {}]
  %s2 = inlined_call_operand.vmem [shape: f32[1,32], index: 2, kind: input, shape index: {}]
  %s3 = inlined_call_operand.vmem [shape: bf16[32,64], index: 3, kind: input, shape index: {}]
  %s4 = inlined_call_operand.vmem [shape: f32[1,64], index: 4, kind: input, shape index: {}]
  %s5 = inlined_call_operand.hbm [shape: f32[16,64], index: 5, kind: output, shape index: {}]
  %s6 = sld [smem:[#allocation0]]
  $region30: #{gpt_forward.13} parent=0
    _
  %s8 = ssub.s32 1, %s6
  %s9 = scalar_select 0, %s8, %s6
  $region1: #{gpt_forward.13} parent=0
    #allocation2 [shape = 'u8[8192]{0}', space=vmem, size = 0x2000, scoped, tag = 'output window, operand 0, single buffered']
    #allocation3 [shape = 's32[1]{0}', space=sflag, size = 0x4, scoped, tag = 'scoped memory for gpt_forward.13']
    %10 = vsyncpa [#allocation3], 0
    // Predicated region
    $region2: #{gpt_forward.13} parent=1 // pred_check
      _
    $region3: #{gpt_forward.13} parent=1 // pred_check_branch
      %12 = sbr.rel (0) target = $region5
    $region4: #{gpt_forward.13} parent=1 // pred_region
      _
    $region5: #{gpt_forward.13} parent=1 // pred_fallthru
      _
    // Predicated region
    $region6: #{gpt_forward.13} parent=1 // pred_check
      _
    $region7: #{gpt_forward.13} parent=1 // pred_check_branch
      %14 = sbr.rel (0) target = $region9
    $region8: #{gpt_forward.13} parent=1 // pred_region
      _
    $region9: #{gpt_forward.13} parent=1 // pred_fallthru
      _
    // Predicated region
    $region10: #{gpt_forward.13} parent=1 // pred_check
      _
    $region11: #{gpt_forward.13} parent=1 // pred_check_branch
      %16 = sbr.rel (0) target = $region13
    $region12: #{gpt_forward.13} parent=1 // pred_region
      _
    $region13: #{gpt_forward.13} parent=1 // pred_fallthru
      _
    // Predicated region
    $region14: #{gpt_forward.13} parent=1 // pred_check
      _
    $region15: #{gpt_forward.13} parent=1 // pred_check_branch
      %18 = sbr.rel (0) target = $region17
    $region16: #{gpt_forward.13} parent=1 // pred_region
      _
    $region17: #{gpt_forward.13} parent=1 // pred_fallthru
      _
    // Predicated region
    $region18: #{gpt_forward.13} parent=1 // pred_check
      _
    $region19: #{gpt_forward.13} parent=1 // pred_check_branch
      %20 = sbr.rel (0) target = $region21
    $region20: #{gpt_forward.13} parent=1 // pred_region
      _
    $region21: #{gpt_forward.13} parent=1 // pred_fallthru
      _
    %v22 = vld [vmem:[%s0] sm:$0xff]
    %v23 = vld [vmem:[%s0 + $0x8] sm:$0xff]
    %vm24 = vcmask 261120
    %v25 = vsel %vm24, %v22, 0.0
    %26 = vadd.xlane.f32.xlu0 %v25
    %v27 = vpop.xlane.xlu0 %26
    %v28 = vsel %vm24, %v23, 0.0
    %29 = vadd.xlane.f32.xlu0 %v28
    %v30 = vpop.xlane.xlu0 %29
    %v31 = vrcp.pop 32.0
    %v32 = vmul.f32 %v27, %v31
    %v33 = vmul.f32 %v30, %v31
    %v34 = vsub.f32 %v22, %v32
    %v35 = vsub.f32 %v23, %v33
    %v36 = vmul.f32 %v34, %v34
    %v37 = vmul.f32 %v35, %v35
    %v38 = vsel %vm24, %v36, 0.0
    %39 = vadd.xlane.f32.xlu0 %v38
    %v40 = vpop.xlane.xlu0 %39
    %v41 = vsel %vm24, %v37, 0.0
    %42 = vadd.xlane.f32.xlu0 %v41
    %v43 = vpop.xlane.xlu0 %42
    %v44 = vmul.f32 %v40, %v31
    %v45 = vmul.f32 %v43, %v31
    %v46 = vadd.f32 %v44, 1e-05
    %v47 = vadd.f32 %v45, 1e-05
    %v48 = vrsqrt.pop %v46
    %v49 = vrsqrt.pop %v47
    %v50 = vmul.f32 %v34, %v48
    %v51 = vmul.f32 %v35, %v49
    %v52 = vld [vmem:[%s1] sm:$0x1]
    %v54 = vlaneseq
    %v55 = vshrl.u32 %v54, 7
    %v56 = vsub.s32 0, %v55
    %v57 = vrot.slane %v52, %v56
    %v59 = vmul.f32 %v50, %v57
    %v60 = vmul.f32 %v51, %v57
    %v61 = vld [vmem:[%s2] sm:$0x1]
    %v63 = vlaneseq
    %v64 = vshrl.u32 %v63, 7
    %v65 = vsub.s32 0, %v64
    %v66 = vrot.slane %v61, %v65
    %v68 = vadd.f32 %v59, %v66
    %v69 = vadd.f32 %v60, %v66
    %v70 = vpack.c.bf16 %v69, %v68
    %v71 = vld [vmem:[%s3] sm:$0xf]
    %v72 = vld [vmem:[%s3 + $0x4] sm:$0xf]
    %v73 = vld [vmem:[%s3 + $0x8] sm:$0xf]
    %v74 = vld [vmem:[%s3 + $0xc] sm:$0xf]
    %v75 = vld [vmem:[%s4] sm:$0x1]
    %v77 = vlaneseq
    %v78 = vshrl.u32 %v77, 7
    %v79 = vsub.s32 0, %v78
    %v80 = vrot.slane %v75, %v79
    %v86 = vunpack.c.l.b16 %v71
    %v87 = vunpack.c.l.b16 %v72
    %v88 = vunpack.c.l.b16 %v73
    %v89 = vunpack.c.l.b16 %v74
    %v90 = vpack.c.b16 %v87, %v86
    %v91 = vpack.c.b16 %v89, %v88
    %v95 = vsel %vm24, %v70, 0
    %97 = vmatprep.subr.bf16.mxu0 0
    %98 = vmatpush1.bf16.msra.mxu0 %v90
    %99 = vmatprep.subr.bf16.mxu0 0
    %100 = vmatpush1.bf16.msra.mxu0 %v91
    %101 = vmatprep.subr.bf16.mxu0 0
    %102 = vmatpush1.bf16.msra.mxu0 0
    %103 = vmatprep.subr.bf16.mxu0 0
    %104 = vmatpush1.bf16.msra.mxu0 0
    %105 = vmatprep.subr.bf16.mxu0 0
    %106 = vmatpush1.bf16.msra.mxu0 0
    %107 = vmatprep.subr.bf16.mxu0 0
    %108 = vmatpush1.bf16.msra.mxu0 0
    %109 = vmatprep.subr.bf16.mxu0 0
    %110 = vmatpush1.bf16.msra.mxu0 0
    %111 = vmatprep.subr.bf16.mxu0 0
    %112 = vmatpush1.bf16.msra.mxu0 0
    %113 = vmatprep.subr.bf16.mxu0 0
    %114 = vmatpush1.bf16.msra.mxu0 0
    %115 = vmatprep.subr.bf16.mxu0 0
    %116 = vmatpush1.bf16.msra.mxu0 0
    %117 = vmatprep.subr.bf16.mxu0 0
    %118 = vmatpush1.bf16.msra.mxu0 0
    %119 = vmatprep.subr.bf16.mxu0 0
    %120 = vmatpush1.bf16.msra.mxu0 0
    %121 = vmatprep.subr.bf16.mxu0 0
    %122 = vmatpush1.bf16.msra.mxu0 0
    %123 = vmatprep.subr.bf16.mxu0 0
    %124 = vmatpush1.bf16.msra.mxu0 0
    %125 = vmatprep.subr.bf16.mxu0 0
    %126 = vmatpush1.bf16.msra.mxu0 0
    %127 = vmatprep.subr.bf16.mxu0 0
    %128 = vmatpush1.bf16.msra.mxu0 0
    %129 = vmatprep.mubr.bf16.mxu0 0
    %130 = vmatmul.mubr.bf16.gmra.mrb[0].mxu0 %v95
    %v131 = vpop.f32.mrb[0].mxu0
    %v132 = vadd.f32 %v80, %v131
    %v133 = vpop.f32.mrb[0].mxu0
    %v134 = vpop.f32.mrb[0].mxu0
    %v135 = vadd.f32 %v80, %v134
    %v136 = vpop.f32.mrb[0].mxu0
    %137 = vdwg.mxu0
    %vm138 = vcmask 523264
    %139 = vst.msk [vmem:[#allocation2] sm:$0xff] %vm138, %v132
    %140 = vst.msk [vmem:[#allocation2 + $0x8] sm:$0xff] %vm138, %v135
    // Predicated region
    $region22: #{gpt_forward.13} parent=1 // pred_check
      _
    $region23: #{gpt_forward.13} parent=1 // pred_check_branch
      %142 = sbr.rel (0) target = $region25
    $region24: #{gpt_forward.13} parent=1 // pred_region
      %s144 = ssub.s32 256, 256
      %145 = vsyncadd [#allocation3], %s144
      %s146 = sshll.u32 [#allocation2], 4
      %s147 = int_to_ptr.vmem [resolvable:$true] %s146
      %152 = dma.vmem_to_hbm [thread:$0]  %s147, 256, %s5, [#allocation3], 128, 128, 8
    $region25: #{gpt_forward.13} parent=1 // pred_fallthru
      _
    // Predicated region
    $region26: #{gpt_forward.13} parent=1 // pred_check
      _
    $region27: #{gpt_forward.13} parent=1 // pred_check_branch
      %154 = sbr.rel (0) target = $region29
    $region28: #{gpt_forward.13} parent=1 // pred_region
      %155 = dma.done [#allocation3], 256
    $region29: #{gpt_forward.13} parent=1 // pred_fallthru
      _
    %156 = vsyncpa [#allocation3], 1

// kernel: gpt_forward.8
$region0: #{gpt_forward.8}
  #allocation0 [shape = 'u32[]', space=smem, size = 0x4, offset = 0x4, fixed_abs, tag = 'smem constant byte address 0x4 - core index']
  #allocation1 [shape = 'u32[144,128]{1,0:T(1,128)}', space=vmem, size = 0x12000, scoped, tag = 'internal scratch']
  %s0 = inlined_call_operand.vmem [shape: f32[2,8,32], index: 0, kind: input, shape index: {}]
  %s1 = inlined_call_operand.vmem [shape: f32[2,4,8,8], index: 1, kind: input, shape index: {}]
  %s2 = inlined_call_operand.vmem [shape: f32[2,4,8,8], index: 2, kind: input, shape index: {}]
  %s3 = inlined_call_operand.vmem [shape: f32[2,4,8,8], index: 3, kind: input, shape index: {}]
  %s4 = inlined_call_operand.vmem [shape: bf16[4,8,32], index: 4, kind: input, shape index: {}]
  %s5 = inlined_call_operand.vmem [shape: f32[1,32], index: 5, kind: input, shape index: {}]
  %s6 = inlined_call_operand.vmem [shape: f32[1,32], index: 6, kind: input, shape index: {}]
  %s7 = inlined_call_operand.vmem [shape: f32[1,32], index: 7, kind: input, shape index: {}]
  %s8 = inlined_call_operand.vmem [shape: f32[2,8,32], index: 8, kind: output, shape index: {}]
  %s9 = sld [smem:[#allocation0]]
  $region65: #{gpt_forward.8} parent=0
    _
  %s11 = ssub.s32 1, %s9
  %s12 = scalar_select 0, %s11, %s9
  loop: start=0, step=1, limit=4
  $region2: #{gpt_forward.8} parent=0 // loop_pre_header
    _
  $region3: #{gpt_forward.8} parent=0 // loop_header
    %s14 = sphi 0, %s18
    %p15 = scmp.ge.s32.totalorder %s14, 4
    %s24 = sphi 0, %s26
    %s27 = sphi 0, %s24
    %s28 = sphi 0, %s27
    %s44 = sphi 0, %s28
    %s50 = sphi 0, %s52
    %s53 = sphi 0, %s50
    %s54 = sphi 0, %s53
    %s70 = sphi 0, %s54
    %s76 = sphi 0, %s78
    %s79 = sphi 0, %s76
    %s80 = sphi 0, %s79
    %s96 = sphi 0, %s80
    %s102 = sphi 0, %s104
    %s105 = sphi 0, %s102
    %s106 = sphi 0, %s105
    %s122 = sphi 0, %s106
    %s126 = sphi 0, %s126
    %s128 = sphi 0, %s126
    %s129 = sphi 0, %s128
    %s143 = sphi 0, %s129
    %s147 = sphi 0, %s147
    %s149 = sphi 0, %s147
    %s150 = sphi 0, %s149
    %s164 = sphi 0, %s150
    %s168 = sphi 0, %s168
    %s170 = sphi 0, %s168
    %s171 = sphi 0, %s170
    %s185 = sphi 0, %s171
    %s189 = sphi 0, %s189
    %s191 = sphi 0, %s189
    %s192 = sphi 0, %s191
    %s206 = sphi 0, %s192
    %s212 = sphi 0, %s214
    %s215 = sphi 0, %s212
    %s216 = sphi 0, %s215
    %s232 = sphi 0, %s216
  $region4: #{gpt_forward.8} parent=0 // loop_header_branch
    %17 = sbr.rel (%p15) target = $region8
  $region5: #{gpt_forward.8} parent=0 // loop_body
    %s19 = ssub.s32 %s14, 1
    %s20 = ssub.s32 %s14, 2
    %s21 = sadd.s32 %s14, 1
    %s22 = ssub.s32 %s14, %s21
    %p23 = scmp.eq.s32.totalorder %s22, 0
    %s25 = sadd.s32 %s24, 1
    %s26 = scalar_select %p23, %s24, %s25
    %p29 = pneg %p23
    %p30 = scmp.eq.s32.totalorder %s14, 1
    %p31 = por %p29, %p30
    %p32 = scmp.ne.s32.totalorder %s24, %s27
    %p33 = scmp.eq.s32.totalorder %s14, 0
    %p34 = por %p32, %p33
    %p35 = scmp.ne.s32.totalorder %s24, %s27
    %p36 = scmp.eq.s32.totalorder %s19, 1
    %p37 = por %p35, %p36
    %p38 = scmp.ne.s32.totalorder %s27, %s28
    %p39 = scmp.eq.s32.totalorder %s19, 0
    %p40 = por %p38, %p39
    %p41 = scmp.ne.s32.totalorder %s27, %s28
    %p42 = scmp.eq.s32.totalorder %s20, 1
    %p43 = por %p41, %p42
    %p45 = scmp.ne.s32.totalorder %s28, %s44
    %p46 = scmp.eq.s32.totalorder %s20, 0
    %p47 = por %p45, %p46
    %s48 = ssub.s32 %s14, %s21
    %p49 = scmp.eq.s32.totalorder %s48, 0
    %s51 = sadd.s32 %s50, 1
    %s52 = scalar_select %p49, %s50, %s51
    %p55 = pneg %p49
    %p56 = scmp.eq.s32.totalorder %s14, 1
    %p57 = por %p55, %p56
    %p58 = scmp.ne.s32.totalorder %s50, %s53
    %p59 = scmp.eq.s32.totalorder %s14, 0
    %p60 = por %p58, %p59
    %p61 = scmp.ne.s32.totalorder %s50, %s53
    %p62 = scmp.eq.s32.totalorder %s19, 1
    %p63 = por %p61, %p62
    %p64 = scmp.ne.s32.totalorder %s53, %s54
    %p65 = scmp.eq.s32.totalorder %s19, 0
    %p66 = por %p64, %p65
    %p67 = scmp.ne.s32.totalorder %s53, %s54
    %p68 = scmp.eq.s32.totalorder %s20, 1
    %p69 = por %p67, %p68
    %p71 = scmp.ne.s32.totalorder %s54, %s70
    %p72 = scmp.eq.s32.totalorder %s20, 0
    %p73 = por %p71, %p72
    %s74 = ssub.s32 %s14, %s21
    %p75 = scmp.eq.s32.totalorder %s74, 0
    %s77 = sadd.s32 %s76, 1
    %s78 = scalar_select %p75, %s76, %s77
    %p81 = pneg %p75
    %p82 = scmp.eq.s32.totalorder %s14, 1
    %p83 = por %p81, %p82
    %p84 = scmp.ne.s32.totalorder %s76, %s79
    %p85 = scmp.eq.s32.totalorder %s14, 0
    %p86 = por %p84, %p85
    %p87 = scmp.ne.s32.totalorder %s76, %s79
    %p88 = scmp.eq.s32.totalorder %s19, 1
    %p89 = por %p87, %p88
    %p90 = scmp.ne.s32.totalorder %s79, %s80
    %p91 = scmp.eq.s32.totalorder %s19, 0
    %p92 = por %p90, %p91
    %p93 = scmp.ne.s32.totalorder %s79, %s80
    %p94 = scmp.eq.s32.totalorder %s20, 1
    %p95 = por %p93, %p94
    %p97 = scmp.ne.s32.totalorder %s80, %s96
    %p98 = scmp.eq.s32.totalorder %s20, 0
    %p99 = por %p97, %p98
    %s100 = ssub.s32 %s14, %s21
    %p101 = scmp.eq.s32.totalorder %s100, 0
    %s103 = sadd.s32 %s102, 1
    %s104 = scalar_select %p101, %s102, %s103
    %p107 = pneg %p101
    %p108 = scmp.eq.s32.totalorder %s14, 1
    %p109 = por %p107, %p108
    %p110 = scmp.ne.s32.totalorder %s102, %s105
    %p111 = scmp.eq.s32.totalorder %s14, 0
    %p112 = por %p110, %p111
    %p113 = scmp.ne.s32.totalorder %s102, %s105
    %p114 = scmp.eq.s32.totalorder %s19, 1
    %p115 = por %p113, %p114
    %p116 = scmp.ne.s32.totalorder %s105, %s106
    %p117 = scmp.eq.s32.totalorder %s19, 0
    %p118 = por %p116, %p117
    %p119 = scmp.ne.s32.totalorder %s105, %s106
    %p120 = scmp.eq.s32.totalorder %s20, 1
    %p121 = por %p119, %p120
    %p123 = scmp.ne.s32.totalorder %s106, %s122
    %p124 = scmp.eq.s32.totalorder %s20, 0
    %p125 = por %p123, %p124
    %s127 = sadd.s32 %s126, 1
    %p130 = scmp.eq.s32.totalorder %s14, 1
    %p131 = scmp.ne.s32.totalorder %s126, %s128
    %p132 = scmp.eq.s32.totalorder %s14, 0
    %p133 = por %p131, %p132
    %p134 = scmp.ne.s32.totalorder %s126, %s128
    %p135 = scmp.eq.s32.totalorder %s19, 1
    %p136 = por %p134, %p135
    %p137 = scmp.ne.s32.totalorder %s128, %s129
    %p138 = scmp.eq.s32.totalorder %s19, 0
    %p139 = por %p137, %p138
    %p140 = scmp.ne.s32.totalorder %s128, %s129
    %p141 = scmp.eq.s32.totalorder %s20, 1
    %p142 = por %p140, %p141
    %p144 = scmp.ne.s32.totalorder %s129, %s143
    %p145 = scmp.eq.s32.totalorder %s20, 0
    %p146 = por %p144, %p145
    %s148 = sadd.s32 %s147, 1
    %p151 = scmp.eq.s32.totalorder %s14, 1
    %p152 = scmp.ne.s32.totalorder %s147, %s149
    %p153 = scmp.eq.s32.totalorder %s14, 0
    %p154 = por %p152, %p153
    %p155 = scmp.ne.s32.totalorder %s147, %s149
    %p156 = scmp.eq.s32.totalorder %s19, 1
    %p157 = por %p155, %p156
    %p158 = scmp.ne.s32.totalorder %s149, %s150
    %p159 = scmp.eq.s32.totalorder %s19, 0
    %p160 = por %p158, %p159
    %p161 = scmp.ne.s32.totalorder %s149, %s150
    %p162 = scmp.eq.s32.totalorder %s20, 1
    %p163 = por %p161, %p162
    %p165 = scmp.ne.s32.totalorder %s150, %s164
    %p166 = scmp.eq.s32.totalorder %s20, 0
    %p167 = por %p165, %p166
    %s169 = sadd.s32 %s168, 1
    %p172 = scmp.eq.s32.totalorder %s14, 1
    %p173 = scmp.ne.s32.totalorder %s168, %s170
    %p174 = scmp.eq.s32.totalorder %s14, 0
    %p175 = por %p173, %p174
    %p176 = scmp.ne.s32.totalorder %s168, %s170
    %p177 = scmp.eq.s32.totalorder %s19, 1
    %p178 = por %p176, %p177
    %p179 = scmp.ne.s32.totalorder %s170, %s171
    %p180 = scmp.eq.s32.totalorder %s19, 0
    %p181 = por %p179, %p180
    %p182 = scmp.ne.s32.totalorder %s170, %s171
    %p183 = scmp.eq.s32.totalorder %s20, 1
    %p184 = por %p182, %p183
    %p186 = scmp.ne.s32.totalorder %s171, %s185
    %p187 = scmp.eq.s32.totalorder %s20, 0
    %p188 = por %p186, %p187
    %s190 = sadd.s32 %s189, 1
    %p193 = scmp.eq.s32.totalorder %s14, 1
    %p194 = scmp.ne.s32.totalorder %s189, %s191
    %p195 = scmp.eq.s32.totalorder %s14, 0
    %p196 = por %p194, %p195
    %p197 = scmp.ne.s32.totalorder %s189, %s191
    %p198 = scmp.eq.s32.totalorder %s19, 1
    %p199 = por %p197, %p198
    %p200 = scmp.ne.s32.totalorder %s191, %s192
    %p201 = scmp.eq.s32.totalorder %s19, 0
    %p202 = por %p200, %p201
    %p203 = scmp.ne.s32.totalorder %s191, %s192
    %p204 = scmp.eq.s32.totalorder %s20, 1
    %p205 = por %p203, %p204
    %p207 = scmp.ne.s32.totalorder %s192, %s206
    %p208 = scmp.eq.s32.totalorder %s20, 0
    %p209 = por %p207, %p208
    %s210 = ssub.s32 %s14, %s21
    %p211 = scmp.eq.s32.totalorder %s210, 0
    %s213 = sadd.s32 %s212, 1
    %s214 = scalar_select %p211, %s212, %s213
    %p217 = pneg %p211
    %p218 = scmp.eq.s32.totalorder %s14, 1
    %p219 = por %p217, %p218
    %p220 = scmp.ne.s32.totalorder %s212, %s215
    %p221 = scmp.eq.s32.totalorder %s14, 0
    %p222 = por %p220, %p221
    %p223 = scmp.ne.s32.totalorder %s212, %s215
    %p224 = scmp.eq.s32.totalorder %s19, 1
    %p225 = por %p223, %p224
    %p226 = scmp.ne.s32.totalorder %s215, %s216
    %p227 = scmp.eq.s32.totalorder %s19, 0
    %p228 = por %p226, %p227
    %p229 = scmp.ne.s32.totalorder %s215, %s216
    %p230 = scmp.eq.s32.totalorder %s20, 1
    %p231 = por %p229, %p230
    %p233 = scmp.ne.s32.totalorder %s216, %s232
    %p234 = scmp.eq.s32.totalorder %s20, 0
    %p235 = por %p233, %p234
    %p236 = scmp.le.s32.totalorder 1, %s14
    %p237 = scmp.lt.s32.totalorder %s14, 3
    %p238 = pnand %p236, %p237
    %p239 = pneg %p238
    // Predicated region
    $region9: #{gpt_forward.8} parent=5 // pred_check
      _
    $region10: #{gpt_forward.8} parent=5 // pred_check_branch
      %241 = sbr.rel (%p238) target = $region12
    $region11: #{gpt_forward.8} parent=5 // pred_region
      %s242 = ssub.s32 %s14, 1
      // Predicated region
      $region13: #{gpt_forward.8} parent=11 // pred_check
        %p243 = pneg %p139
      $region14: #{gpt_forward.8} parent=11 // pred_check_branch
        %245 = sbr.rel (%p243) target = $region16
      $region15: #{gpt_forward.8} parent=11 // pred_region
        _
      $region16: #{gpt_forward.8} parent=11 // pred_fallthru
        _
      // Predicated region
      $region17: #{gpt_forward.8} parent=11 // pred_check
        %p246 = pneg %p160
      $region18: #{gpt_forward.8} parent=11 // pred_check_branch
        %248 = sbr.rel (%p246) target = $region20
      $region19: #{gpt_forward.8} parent=11 // pred_region
        _
      $region20: #{gpt_forward.8} parent=11 // pred_fallthru
        _
      // Predicated region
      $region21: #{gpt_forward.8} parent=11 // pred_check
        %p249 = pneg %p181
      $region22: #{gpt_forward.8} parent=11 // pred_check_branch
        %251 = sbr.rel (%p249) target = $region24
      $region23: #{gpt_forward.8} parent=11 // pred_region
        _
      $region24: #{gpt_forward.8} parent=11 // pred_fallthru
        _
      // Predicated region
      $region25: #{gpt_forward.8} parent=11 // pred_check
        %p252 = pneg %p202
      $region26: #{gpt_forward.8} parent=11 // pred_check_branch
        %254 = sbr.rel (%p252) target = $region28
      $region27: #{gpt_forward.8} parent=11 // pred_region
        _
      $region28: #{gpt_forward.8} parent=11 // pred_fallthru
        _
    $region12: #{gpt_forward.8} parent=5 // pred_fallthru
      _
    %p255 = scmp.lt.s32.totalorder %s14, 2
    // Predicated region
    $region29: #{gpt_forward.8} parent=5 // pred_check
      %p256 = pneg %p255
    $region30: #{gpt_forward.8} parent=5 // pred_check_branch
      %258 = sbr.rel (%p256) target = $region32
    $region31: #{gpt_forward.8} parent=5 // pred_region
      // Predicated region
      $region33: #{gpt_forward.8} parent=31 // pred_check
        %p259 = pneg %p34
      $region34: #{gpt_forward.8} parent=31 // pred_check_branch
        %261 = sbr.rel (%p259) target = $region36
      $region35: #{gpt_forward.8} parent=31 // pred_region
        %p262 = scmp.lt.s32.totalorder %s14, 1
        %s263 = scalar_select %p262, %s14, 1
        %s264 = smul.addr %s263, 8
        %s265 = scalar_lea.vmem %s0, %s264
      $region36: #{gpt_forward.8} parent=31 // pred_fallthru
        _
      // Predicated region
      $region37: #{gpt_forward.8} parent=31 // pred_check
        %p266 = pneg %p60
      $region38: #{gpt_forward.8} parent=31 // pred_check_branch
        %268 = sbr.rel (%p266) target = $region40
      $region39: #{gpt_forward.8} parent=31 // pred_region
        %p269 = scmp.lt.s32.totalorder %s14, 1
        %s270 = scalar_select %p269, %s14, 1
        %s271 = smul.addr %s270, 4
        %s272 = smul.addr %s271, 8
        %s273 = scalar_lea.vmem %s1, %s272
      $region40: #{gpt_forward.8} parent=31 // pred_fallthru
        _
      // Predicated region
      $region41: #{gpt_forward.8} parent=31 // pred_check
        %p274 = pneg %p86
      $region42: #{gpt_forward.8} parent=31 // pred_check_branch
        %276 = sbr.rel (%p274) target = $region44
      $region43: #{gpt_forward.8} parent=31 // pred_region
        %p277 = scmp.lt.s32.totalorder %s14, 1
        %s278 = scalar_select %p277, %s14, 1
        %s279 = smul.addr %s278, 4
        %s280 = smul.addr %s279, 8
        %s281 = scalar_lea.vmem %s2, %s280
      $region44: #{gpt_forward.8} parent=31 // pred_fallthru
        _
      // Predicated region
      $region45: #{gpt_forward.8} parent=31 // pred_check
        %p282 = pneg %p112
      $region46: #{gpt_forward.8} parent=31 // pred_check_branch
        %284 = sbr.rel (%p282) target = $region48
      $region47: #{gpt_forward.8} parent=31 // pred_region
        %p285 = scmp.lt.s32.totalorder %s14, 1
        %s286 = scalar_select %p285, %s14, 1
        %s287 = smul.addr %s286, 4
        %s288 = smul.addr %s287, 8
        %s289 = scalar_lea.vmem %s3, %s288
      $region48: #{gpt_forward.8} parent=31 // pred_fallthru
        _
    $region32: #{gpt_forward.8} parent=5 // pred_fallthru
      _
    %p290 = scmp.le.s32.totalorder 1, %s14
    %p291 = scmp.lt.s32.totalorder %s14, 3
    %p292 = pnand %p290, %p291
    %p293 = pneg %p292
    // Predicated region
    $region49: #{gpt_forward.8} parent=5 // pred_check
      _
    $region50: #{gpt_forward.8} parent=5 // pred_check_branch
      %295 = sbr.rel (%p292) target = $region52
    $region51: #{gpt_forward.8} parent=5 // pred_region
      %s296 = ssub.s32 %s14, 1
      %p297 = scmp.lt.s32.totalorder %s19, 1
      %s298 = scalar_select %p297, %s19, 1
      %s299 = smul.addr %s298, 8
      %s300 = scalar_lea.vmem %s0, %s299
      %p301 = pneg %p40
      %p302 = pneg %p37
      %p303 = scmp.lt.s32.totalorder %s19, 1
      %s304 = scalar_select %p303, %s19, 1
      %s305 = smul.addr %s304, 4
      %s306 = smul.addr %s305, 8
      %s307 = scalar_lea.vmem %s1, %s306
      %p308 = pneg %p66
      %p309 = pneg %p63
      %p310 = scmp.lt.s32.totalorder %s19, 1
      %s311 = scalar_select %p310, %s19, 1
      %s312 = smul.addr %s311, 4
      %s313 = smul.addr %s312, 8
      %s314 = scalar_lea.vmem %s2, %s313
      %p315 = pneg %p92
      %p316 = pneg %p89
      %p317 = scmp.lt.s32.totalorder %s19, 1
      %s318 = scalar_select %p317, %s19, 1
      %s319 = smul.addr %s318, 4
      %s320 = smul.addr %s319, 8
      %s321 = scalar_lea.vmem %s3, %s320
      %p322 = pneg %p118
      %p323 = pneg %p115
      %p324 = pneg %p139
      %p325 = pneg %p136
      %p326 = pneg %p160
      %p327 = pneg %p157
      %p328 = pneg %p181
      %p329 = pneg %p178
      %p330 = pneg %p202
      %p331 = pneg %p199
      %p332 = pneg %p228
      %p333 = pneg %p225
      %p334 = scmp.lt.s32.totalorder %s19, 1
      %s335 = scalar_select %p334, %s19, 1
      %s336 = smul.addr %s335, 8
      %s337 = scalar_lea.vmem %s8, %s336
      %p338 = scmp.lt.s32.totalorder %s19, 1
      %s339 = scalar_select %p338, %s19, 1
      %s340 = smul.addr %s339, 8
      %s341 = scalar_lea.vmem %s0, %s340
      %p342 = scmp.lt.s32.totalorder %s19, 1
      %s343 = scalar_select %p342, %s19, 1
      %s344 = smul.addr %s343, 4
      %s345 = smul.addr %s344, 8
      %s346 = scalar_lea.vmem %s1, %s345
      %p347 = scmp.lt.s32.totalorder %s19, 1
      %s348 = scalar_select %p347, %s19, 1
      %s349 = smul.addr %s348, 4
      %s350 = smul.addr %s349, 8
      %s351 = scalar_lea.vmem %s2, %s350
      %p352 = scmp.lt.s32.totalorder %s19, 1
      %s353 = scalar_select %p352, %s19, 1
      %s354 = smul.addr %s353, 4
      %s355 = smul.addr %s354, 8
      %s356 = scalar_lea.vmem %s3, %s355
      %p357 = scmp.lt.s32.totalorder %s19, 1
      %s358 = scalar_select %p357, %s19, 1
      %s359 = smul.addr %s358, 8
      %s360 = scalar_lea.vmem %s8, %s359
      %v362 = vld [vmem:[%s346] sm:$0xff]
      %v363 = vld [vmem:[%s346 + $0x8] sm:$0xff]
      %v364 = vld [vmem:[%s346 + $0x10] sm:$0xff]
      %v365 = vld [vmem:[%s346 + $0x18] sm:$0xff]
      %v366 = vpack.c.bf16 %v362, %v362
      %v367 = vpack.c.bf16 %v363, %v363
      %v368 = vpack.c.bf16 %v364, %v364
      %v369 = vpack.c.bf16 %v365, %v365
      %v370 = vld [vmem:[%s351] sm:$0xff]
      %v371 = vld [vmem:[%s351 + $0x8] sm:$0xff]
      %v372 = vld [vmem:[%s351 + $0x10] sm:$0xff]
      %v373 = vld [vmem:[%s351 + $0x18] sm:$0xff]
      %v374 = vpack.c.bf16 %v370, %v370
      %v375 = vpack.c.bf16 %v371, %v371
      %v376 = vpack.c.bf16 %v372, %v372
      %v377 = vpack.c.bf16 %v373, %v373
      %v378 = vld [vmem:[%s356] sm:$0xff]
      %v379 = vld [vmem:[%s356 + $0x8] sm:$0xff]
      %v380 = vld [vmem:[%s356 + $0x10] sm:$0xff]
      %v381 = vld [vmem:[%s356 + $0x18] sm:$0xff]
      %v382 = vpack.c.bf16 %v378, %v378
      %v383 = vpack.c.bf16 %v379, %v379
      %v384 = vpack.c.bf16 %v380, %v380
      %v385 = vpack.c.bf16 %v381, %v381
      %vm386 = vcmask 64512
      %v388 = vsel %vm386, %v366, 0
      %v391 = vsel %vm386, %v374, 0
      %393 = vmatprep.subr.bf16.mxu0 0
      %394 = vmatpush1.bf16.xpose.msra.mxu0 %v391
      %395 = vmatprep.subr.bf16.mxu0 0
      %396 = vmatpush1.bf16.xpose.msra.mxu0 0
      %397 = vmatprep.subr.bf16.mxu0 0
      %398 = vmatpush1.bf16.xpose.msra.mxu0 0
      %399 = vmatprep.subr.bf16.mxu0 0
      %400 = vmatpush1.bf16.xpose.msra.mxu0 0
      %401 = vmatprep.subr.bf16.mxu0 0
      %402 = vmatpush1.bf16.xpose.msra.mxu0 0
      %403 = vmatprep.subr.bf16.mxu0 0
      %404 = vmatpush1.bf16.xpose.msra.mxu0 0
      %405 = vmatprep.subr.bf16.mxu0 0
      %406 = vmatpush1.bf16.xpose.msra.mxu0 0
      %407 = vmatprep.subr.bf16.mxu0 0
      %408 = vmatpush1.bf16.xpose.msra.mxu0 0
      %409 = vmatprep.subr.bf16.mxu0 0
      %410 = vmatpush1.bf16.xpose.msra.mxu0 0
      %411 = vmatprep.subr.bf16.mxu0 0
      %412 = vmatpush1.bf16.xpose.msra.mxu0 0
      %413 = vmatprep.subr.bf16.mxu0 0
      %414 = vmatpush1.bf16.xpose.msra.mxu0 0
      %415 = vmatprep.subr.bf16.mxu0 0
      %416 = vmatpush1.bf16.xpose.msra.mxu0 0
      %417 = vmatprep.subr.bf16.mxu0 0
      %418 = vmatpush1.bf16.xpose.msra.mxu0 0
      %419 = vmatprep.subr.bf16.mxu0 0
      %420 = vmatpush1.bf16.xpose.msra.mxu0 0
      %421 = vmatprep.subr.bf16.mxu0 0
      %422 = vmatpush1.bf16.xpose.msra.mxu0 0
      %423 = vmatprep.subr.bf16.mxu0 0
      %424 = vmatpush1.bf16.xpose.msra.mxu0 0
      %425 = vmatprep.mubr.bf16.mxu0 0
      %426 = vmatmul.mubr.bf16.gmra.mrb[0].mxu0 %v388
      %v427 = vpop.f32.mrb[0].mxu0
      %v428 = vadd.f32 0.0, %v427
      %v429 = vpop.f32.mrb[0].mxu0
      %v430 = vpop.f32.mrb[0].mxu0
      %v431 = vpop.f32.mrb[0].mxu0
      %432 = vdwg.mxu0
      %v434 = vsel %vm386, %v367, 0
      %v437 = vsel %vm386, %v375, 0
      %439 = vmatprep.subr.bf16.mxu0 0
      %440 = vmatpush1.bf16.xpose.msra.mxu0 %v437
      %441 = vmatprep.subr.bf16.mxu0 0
      %442 = vmatpush1.bf16.xpose.msra.mxu0 0
      %443 = vmatprep.subr.bf16.mxu0 0
      %444 = vmatpush1.bf16.xpose.msra.mxu0 0
      %445 = vmatprep.subr.bf16.mxu0 0
      %446 = vmatpush1.bf16.xpose.msra.mxu0 0
      %447 = vmatprep.subr.bf16.mxu0 0
      %448 = vmatpush1.bf16.xpose.msra.mxu0 0
      %449 = vmatprep.subr.bf16.mxu0 0
      %450 = vmatpush1.bf16.xpose.msra.mxu0 0
      %451 = vmatprep.subr.bf16.mxu0 0
      %452 = vmatpush1.bf16.xpose.msra.mxu0 0
      %453 = vmatprep.subr.bf16.mxu0 0
      %454 = vmatpush1.bf16.xpose.msra.mxu0 0
      %455 = vmatprep.subr.bf16.mxu0 0
      %456 = vmatpush1.bf16.xpose.msra.mxu0 0
      %457 = vmatprep.subr.bf16.mxu0 0
      %458 = vmatpush1.bf16.xpose.msra.mxu0 0
      %459 = vmatprep.subr.bf16.mxu0 0
      %460 = vmatpush1.bf16.xpose.msra.mxu0 0
      %461 = vmatprep.subr.bf16.mxu0 0
      %462 = vmatpush1.bf16.xpose.msra.mxu0 0
      %463 = vmatprep.subr.bf16.mxu0 0
      %464 = vmatpush1.bf16.xpose.msra.mxu0 0
      %465 = vmatprep.subr.bf16.mxu0 0
      %466 = vmatpush1.bf16.xpose.msra.mxu0 0
      %467 = vmatprep.subr.bf16.mxu0 0
      %468 = vmatpush1.bf16.xpose.msra.mxu0 0
      %469 = vmatprep.subr.bf16.mxu0 0
      %470 = vmatpush1.bf16.xpose.msra.mxu0 0
      %471 = vmatprep.mubr.bf16.mxu0 0
      %472 = vmatmul.mubr.bf16.gmra.mrb[0].mxu0 %v434
      %v473 = vpop.f32.mrb[0].mxu0
      %v474 = vadd.f32 0.0, %v473
      %v475 = vpop.f32.mrb[0].mxu0
      %v476 = vpop.f32.mrb[0].mxu0
      %v477 = vpop.f32.mrb[0].mxu0
      %478 = vdwg.mxu0
      %v480 = vsel %vm386, %v368, 0
      %v483 = vsel %vm386, %v376, 0
      %485 = vmatprep.subr.bf16.mxu0 0
      %486 = vmatpush1.bf16.xpose.msra.mxu0 %v483
      %487 = vmatprep.subr.bf16.mxu0 0
      %488 = vmatpush1.bf16.xpose.msra.mxu0 0
      %489 = vmatprep.subr.bf16.mxu0 0
      %490 = vmatpush1.bf16.xpose.msra.mxu0 0
      %491 = vmatprep.subr.bf16.mxu0 0
      %492 = vmatpush1.bf16.xpose.msra.mxu0 0
      %493 = vmatprep.subr.bf16.mxu0 0
      %494 = vmatpush1.bf16.xpose.msra.mxu0 0
      %495 = vmatprep.subr.bf16.mxu0 0
      %496 = vmatpush1.bf16.xpose.msra.mxu0 0
      %497 = vmatprep.subr.bf16.mxu0 0
      %498 = vmatpush1.bf16.xpose.msra.mxu0 0
      %499 = vmatprep.subr.bf16.mxu0 0
      %500 = vmatpush1.bf16.xpose.msra.mxu0 0
      %501 = vmatprep.subr.bf16.mxu0 0
      %502 = vmatpush1.bf16.xpose.msra.mxu0 0
      %503 = vmatprep.subr.bf16.mxu0 0
      %504 = vmatpush1.bf16.xpose.msra.mxu0 0
      %505 = vmatprep.subr.bf16.mxu0 0
      %506 = vmatpush1.bf16.xpose.msra.mxu0 0
      %507 = vmatprep.subr.bf16.mxu0 0
      %508 = vmatpush1.bf16.xpose.msra.mxu0 0
      %509 = vmatprep.subr.bf16.mxu0 0
      %510 = vmatpush1.bf16.xpose.msra.mxu0 0
      %511 = vmatprep.subr.bf16.mxu0 0
      %512 = vmatpush1.bf16.xpose.msra.mxu0 0
      %513 = vmatprep.subr.bf16.mxu0 0
      %514 = vmatpush1.bf16.xpose.msra.mxu0 0
      %515 = vmatprep.subr.bf16.mxu0 0
      %516 = vmatpush1.bf16.xpose.msra.mxu0 0
      %517 = vmatprep.mubr.bf16.mxu0 0
      %518 = vmatmul.mubr.bf16.gmra.mrb[0].mxu0 %v480
      %v519 = vpop.f32.mrb[0].mxu0
      %v520 = vadd.f32 0.0, %v519
      %v521 = vpop.f32.mrb[0].mxu0
      %v522 = vpop.f32.mrb[0].mxu0
      %v523 = vpop.f32.mrb[0].mxu0
      %524 = vdwg.mxu0
      %v526 = vsel %vm386, %v369, 0
      %v529 = vsel %vm386, %v377, 0
      %531 = vmatprep.subr.bf16.mxu0 0
      %532 = vmatpush1.bf16.xpose.msra.mxu0 %v529
      %533 = vmatprep.subr.bf16.mxu0 0
      %534 = vmatpush1.bf16.xpose.msra.mxu0 0
      %535 = vmatprep.subr.bf16.mxu0 0
      %536 = vmatpush1.bf16.xpose.msra.mxu0 0
      %537 = vmatprep.subr.bf16.mxu0 0
      %538 = vmatpush1.bf16.xpose.msra.mxu0 0
      %539 = vmatprep.subr.bf16.mxu0 0
      %540 = vmatpush1.bf16.xpose.msra.mxu0 0
      %541 = vmatprep.subr.bf16.mxu0 0
      %542 = vmatpush1.bf16.xpose.msra.mxu0 0
      %543 = vmatprep.subr.bf16.mxu0 0
      %544 = vmatpush1.bf16.xpose.msra.mxu0 0
      %545 = vmatprep.subr.bf16.mxu0 0
      %546 = vmatpush1.bf16.xpose.msra.mxu0 0
      %547 = vmatprep.subr.bf16.mxu0 0
      %548 = vmatpush1.bf16.xpose.msra.mxu0 0
      %549 = vmatprep.subr.bf16.mxu0 0
      %550 = vmatpush1.bf16.xpose.msra.mxu0 0
      %551 = vmatprep.subr.bf16.mxu0 0
      %552 = vmatpush1.bf16.xpose.msra.mxu0 0
      %553 = vmatprep.subr.bf16.mxu0 0
      %554 = vmatpush1.bf16.xpose.msra.mxu0 0
      %555 = vmatprep.subr.bf16.mxu0 0
      %556 = vmatpush1.bf16.xpose.msra.mxu0 0
      %557 = vmatprep.subr.bf16.mxu0 0
      %558 = vmatpush1.bf16.xpose.msra.mxu0 0
      %559 = vmatprep.subr.bf16.mxu0 0
      %560 = vmatpush1.bf16.xpose.msra.mxu0 0
      %561 = vmatprep.subr.bf16.mxu0 0
      %562 = vmatpush1.bf16.xpose.msra.mxu0 0
      %563 = vmatprep.mubr.bf16.mxu0 0
      %564 = vmatmul.mubr.bf16.gmra.mrb[0].mxu0 %v526
      %v565 = vpop.f32.mrb[0].mxu0
      %v566 = vadd.f32 0.0, %v565
      %v567 = vpop.f32.mrb[0].mxu0
      %v568 = vpop.f32.mrb[0].mxu0
      %v569 = vpop.f32.mrb[0].mxu0
      %570 = vdwg.mxu0
      %v571 = vmul.f32 %v428, 0.35355338
      %v572 = vmul.f32 %v474, 0.35355338
      %v573 = vmul.f32 %v520, 0.35355338
      %v574 = vmul.f32 %v566, 0.35355338
      %v575 = vlaneseq
      %v576 = vshrl.u32 %v575, 7
      %v577 = vlaneseq
      %v578 = vand.u32 %v577, 127
      %vm579 = vcmp.le.s32.totalorder %v578, %v576
      %v580 = vsel %vm579, 1, 0
      %vm581 = vcmp.eq.s32.totalorder %v580, 1
      %v582 = vsel %vm581, %v571, -1e+30
      %v583 = vsel %vm581, %v572, -1e+30
      %v584 = vsel %vm581, %v573, -1e+30
      %v585 = vsel %vm581, %v574, -1e+30
      %v586 = vsel %vm386, %v582, -inf
      %587 = vmax.xlane.f32.xlu0 %v586
      %v588 = vpop.xlane.xlu0 %587
      %v589 = vsel %vm386, %v583, -inf
      %590 = vmax.xlane.f32.xlu0 %v589
      %v591 = vpop.xlane.xlu0 %590
      %v592 = vsel %vm386, %v584, -inf
      %593 = vmax.xlane.f32.xlu0 %v592
      %v594 = vpop.xlane.xlu0 %593
      %v595 = vsel %vm386, %v585, -inf
      %596 = vmax.xlane.f32.xlu0 %v595
      %v597 = vpop.xlane.xlu0 %596
      %v598 = vsub.f32 %v582, %v588
      %v599 = vsub.f32 %v583, %v591
      %v600 = vsub.f32 %v584, %v594
      %v601 = vsub.f32 %v585, %v597
      %v602 = vmul.f32 %v598, 1.442695
      %v603 = vpow.pop %v602
      %v604 = vmul.f32 %v599, 1.442695
      %v605 = vpow.pop %v604
      %v606 = vmul.f32 %v600, 1.442695
      %v607 = vpow.pop %v606
      %v608 = vmul.f32 %v601, 1.442695
      %v609 = vpow.pop %v608
      %v610 = vsel %vm386, %v603, 0.0
      %611 = vadd.xlane.f32.xlu0 %v610
      %v612 = vpop.xlane.xlu0 %611
      %v613 = vsel %vm386, %v605, 0.0
      %614 = vadd.xlane.f32.xlu0 %v613
      %v615 = vpop.xlane.xlu0 %614
      %v616 = vsel %vm386, %v607, 0.0
      %617 = vadd.xlane.f32.xlu0 %v616
      %v618 = vpop.xlane.xlu0 %617
      %v619 = vsel %vm386, %v609, 0.0
      %620 = vadd.xlane.f32.xlu0 %v619
      %v621 = vpop.xlane.xlu0 %620
      %v622 = vpack.c.bf16 %v603, %v603
      %v623 = vpack.c.bf16 %v605, %v605
      %v624 = vpack.c.bf16 %v607, %v607
      %v625 = vpack.c.bf16 %v609, %v609
      %v627 = vsel %vm386, %v622, 0
      %vm629 = vcmask 1043456
      %v631 = vsel %vm629, %v382, 0
      %633 = vmatprep.subr.bf16.mxu0 0
      %634 = vmatpush1.bf16.msra.mxu0 %v631
      %635 = vmatprep.subr.bf16.mxu0 0
      %636 = vmatpush1.bf16.msra.mxu0 0
      %637 = vmatprep.subr.bf16.mxu0 0
      %638 = vmatpush1.bf16.msra.mxu0 0
      %639 = vmatprep.subr.bf16.mxu0 0
      %640 = vmatpush1.bf16.msra.mxu0 0
      %641 = vmatprep.subr.bf16.mxu0 0
      %642 = vmatpush1.bf16.msra.mxu0 0
      %643 = vmatprep.subr.bf16.mxu0 0
      %644 = vmatpush1.bf16.msra.mxu0 0
      %645 = vmatprep.subr.bf16.mxu0 0
      %646 = vmatpush1.bf16.msra.mxu0 0
      %647 = vmatprep.subr.bf16.mxu0 0
      %648 = vmatpush1.bf16.msra.mxu0 0
      %649 = vmatprep.subr.bf16.mxu0 0
      %650 = vmatpush1.bf16.msra.mxu0 0
      %651 = vmatprep.subr.bf16.mxu0 0
      %652 = vmatpush1.bf16.msra.mxu0 0
      %653 = vmatprep.subr.bf16.mxu0 0
      %654 = vmatpush1.bf16.msra.mxu0 0
      %655 = vmatprep.subr.bf16.mxu0 0
      %656 = vmatpush1.bf16.msra.mxu0 0
      %657 = vmatprep.subr.bf16.mxu0 0
      %658 = vmatpush1.bf16.msra.mxu0 0
      %659 = vmatprep.subr.bf16.mxu0 0
      %660 = vmatpush1.bf16.msra.mxu0 0
      %661 = vmatprep.subr.bf16.mxu0 0
      %662 = vmatpush1.bf16.msra.mxu0 0
      %663 = vmatprep.subr.bf16.mxu0 0
      %664 = vmatpush1.bf16.msra.mxu0 0
      %665 = vmatprep.mubr.bf16.mxu0 0
      %666 = vmatmul.mubr.bf16.gmra.mrb[0].mxu0 %v627
      %v667 = vpop.f32.mrb[0].mxu0
      %v668 = vadd.f32 0.0, %v667
      %v669 = vpop.f32.mrb[0].mxu0
      %v670 = vpop.f32.mrb[0].mxu0
      %v671 = vpop.f32.mrb[0].mxu0
      %672 = vdwg.mxu0
      %v674 = vsel %vm386, %v623, 0
      %v677 = vsel %vm629, %v383, 0
      %679 = vmatprep.subr.bf16.mxu0 0
      %680 = vmatpush1.bf16.msra.mxu0 %v677
      %681 = vmatprep.subr.bf16.mxu0 0
      %682 = vmatpush1.bf16.msra.mxu0 0
      %683 = vmatprep.subr.bf16.mxu0 0
      %684 = vmatpush1.bf16.msra.mxu0 0
      %685 = vmatprep.subr.bf16.mxu0 0
      %686 = vmatpush1.bf16.msra.mxu0 0
      %687 = vmatprep.subr.bf16.mxu0 0
      %688 = vmatpush1.bf16.msra.mxu0 0
      %689 = vmatprep.subr.bf16.mxu0 0
      %690 = vmatpush1.bf16.msra.mxu0 0
      %691 = vmatprep.subr.bf16.mxu0 0
      %692 = vmatpush1.bf16.msra.mxu0 0
      %693 = vmatprep.subr.bf16.mxu0 0
      %694 = vmatpush1.bf16.msra.mxu0 0
      %695 = vmatprep.subr.bf16.mxu0 0
      %696 = vmatpush1.bf16.msra.mxu0 0
      %697 = vmatprep.subr.bf16.mxu0 0
      %698 = vmatpush1.bf16.msra.mxu0 0
      %699 = vmatprep.subr.bf16.mxu0 0
      %700 = vmatpush1.bf16.msra.mxu0 0
      %701 = vmatprep.subr.bf16.mxu0 0
      %702 = vmatpush1.bf16.msra.mxu0 0
      %703 = vmatprep.subr.bf16.mxu0 0
      %704 = vmatpush1.bf16.msra.mxu0 0
      %705 = vmatprep.subr.bf16.mxu0 0
      %706 = vmatpush1.bf16.msra.mxu0 0
      %707 = vmatprep.subr.bf16.mxu0 0
      %708 = vmatpush1.bf16.msra.mxu0 0
      %709 = vmatprep.subr.bf16.mxu0 0
      %710 = vmatpush1.bf16.msra.mxu0 0
      %711 = vmatprep.mubr.bf16.mxu0 0
      %712 = vmatmul.mubr.bf16.gmra.mrb[0].mxu0 %v674
      %v713 = vpop.f32.mrb[0].mxu0
      %v714 = vadd.f32 0.0, %v713
      %v715 = vpop.f32.mrb[0].mxu0
      %v716 = vpop.f32.mrb[0].mxu0
      %v717 = vpop.f32.mrb[0].mxu0
      %718 = vdwg.mxu0
      %v720 = vsel %vm386, %v624, 0
      %v723 = vsel %vm629, %v384, 0
      %725 = vmatprep.subr.bf16.mxu0 0
      %726 = vmatpush1.bf16.msra.mxu0 %v723
      %727 = vmatprep.subr.bf16.mxu0 0
      %728 = vmatpush1.bf16.msra.mxu0 0
      %729 = vmatprep.subr.bf16.mxu0 0
      %730 = vmatpush1.bf16.msra.mxu0 0
      %731 = vmatprep.subr.bf16.mxu0 0
      %732 = vmatpush1.bf16.msra.mxu0 0
      %733 = vmatprep.subr.bf16.mxu0 0
      %734 = vmatpush1.bf16.msra.mxu0 0
      %735 = vmatprep.subr.bf16.mxu0 0
      %736 = vmatpush1.bf16.msra.mxu0 0
      %737 = vmatprep.subr.bf16.mxu0 0
      %738 = vmatpush1.bf16.msra.mxu0 0
      %739 = vmatprep.subr.bf16.mxu0 0
      %740 = vmatpush1.bf16.msra.mxu0 0
      %741 = vmatprep.subr.bf16.mxu0 0
      %742 = vmatpush1.bf16.msra.mxu0 0
      %743 = vmatprep.subr.bf16.mxu0 0
      %744 = vmatpush1.bf16.msra.mxu0 0
      %745 = vmatprep.subr.bf16.mxu0 0
      %746 = vmatpush1.bf16.msra.mxu0 0
      %747 = vmatprep.subr.bf16.mxu0 0
      %748 = vmatpush1.bf16.msra.mxu0 0
      %749 = vmatprep.subr.bf16.mxu0 0
      %750 = vmatpush1.bf16.msra.mxu0 0
      %751 = vmatprep.subr.bf16.mxu0 0
      %752 = vmatpush1.bf16.msra.mxu0 0
      %753 = vmatprep.subr.bf16.mxu0 0
      %754 = vmatpush1.bf16.msra.mxu0 0
      %755 = vmatprep.subr.bf16.mxu0 0
      %756 = vmatpush1.bf16.msra.mxu0 0
      %757 = vmatprep.mubr.bf16.mxu0 0
      %758 = vmatmul.mubr.bf16.gmra.mrb[0].mxu0 %v720
      %v759 = vpop.f32.mrb[0].mxu0
      %v760 = vadd.f32 0.0, %v759
      %v761 = vpop.f32.mrb[0].mxu0
      %v762 = vpop.f32.mrb[0].mxu0
      %v763 = vpop.f32.mrb[0].mxu0
      %764 = vdwg.mxu0
      %v766 = vsel %vm386, %v625, 0
      %v769 = vsel %vm629, %v385, 0
      %771 = vmatprep.subr.bf16.mxu0 0
      %772 = vmatpush1.bf16.msra.mxu0 %v769
      %773 = vmatprep.subr.bf16.mxu0 0
      %774 = vmatpush1.bf16.msra.mxu0 0
      %775 = vmatprep.subr.bf16.mxu0 0
      %776 = vmatpush1.bf16.msra.mxu0 0
      %777 = vmatprep.subr.bf16.mxu0 0
      %778 = vmatpush1.bf16.msra.mxu0 0
      %779 = vmatprep.subr.bf16.mxu0 0
      %780 = vmatpush1.bf16.msra.mxu0 0
      %781 = vmatprep.subr.bf16.mxu0 0
      %782 = vmatpush1.bf16.msra.mxu0 0
      %783 = vmatprep.subr.bf16.mxu0 0
      %784 = vmatpush1.bf16.msra.mxu0 0
      %785 = vmatprep.subr.bf16.mxu0 0
      %786 = vmatpush1.bf16.msra.mxu0 0
      %787 = vmatprep.subr.bf16.mxu0 0
      %788 = vmatpush1.bf16.msra.mxu0 0
      %789 = vmatprep.subr.bf16.mxu0 0
      %790 = vmatpush1.bf16.msra.mxu0 0
      %791 = vmatprep.subr.bf16.mxu0 0
      %792 = vmatpush1.bf16.msra.mxu0 0
      %793 = vmatprep.subr.bf16.mxu0 0
      %794 = vmatpush1.bf16.msra.mxu0 0
      %795 = vmatprep.subr.bf16.mxu0 0
      %796 = vmatpush1.bf16.msra.mxu0 0
      %797 = vmatprep.subr.bf16.mxu0 0
      %798 = vmatpush1.bf16.msra.mxu0 0
      %799 = vmatprep.subr.bf16.mxu0 0
      %800 = vmatpush1.bf16.msra.mxu0 0
      %801 = vmatprep.subr.bf16.mxu0 0
      %802 = vmatpush1.bf16.msra.mxu0 0
      %803 = vmatprep.mubr.bf16.mxu0 0
      %804 = vmatmul.mubr.bf16.gmra.mrb[0].mxu0 %v766
      %v805 = vpop.f32.mrb[0].mxu0
      %v806 = vadd.f32 0.0, %v805
      %v807 = vpop.f32.mrb[0].mxu0
      %v808 = vpop.f32.mrb[0].mxu0
      %v809 = vpop.f32.mrb[0].mxu0
      %810 = vdwg.mxu0
      %v811 = vrcp.pop %v612
      %v812 = vrcp.pop %v615
      %v813 = vrcp.pop %v618
      %v814 = vrcp.pop %v621
      %v815 = vmul.f32 %v668, %v811
      %v816 = vmul.f32 %v714, %v812
      %v817 = vmul.f32 %v760, %v813
      %v818 = vmul.f32 %v806, %v814
      %v819 = vpack.c.bf16 %v815, %v815
      %v820 = vpack.c.bf16 %v816, %v816
      %v821 = vpack.c.bf16 %v817, %v817
      %v822 = vpack.c.bf16 %v818, %v818
      %v823 = vld [vmem:[%s4] sm:$0xf]
      %v824 = vld [vmem:[%s4 + $0x4] sm:$0xf]
      %v825 = vld [vmem:[%s4 + $0x8] sm:$0xf]
      %v826 = vld [vmem:[%s4 + $0xc] sm:$0xf]
      %v828 = vsel %vm386, %v819, 0
      %v831 = vsel %vm629, %v823, 0
      %833 = vmatprep.subr.bf16.mxu0 0
      %834 = vmatpush1.bf16.msra.mxu0 %v831
      %835 = vmatprep.subr.bf16.mxu0 0
      %836 = vmatpush1.bf16.msra.mxu0 0
      %837 = vmatprep.subr.bf16.mxu0 0
      %838 = vmatpush1.bf16.msra.mxu0 0
      %839 = vmatprep.subr.bf16.mxu0 0
      %840 = vmatpush1.bf16.msra.mxu0 0
      %841 = vmatprep.subr.bf16.mxu0 0
      %842 = vmatpush1.bf16.msra.mxu0 0
      %843 = vmatprep.subr.bf16.mxu0 0
      %844 = vmatpush1.bf16.msra.mxu0 0
      %845 = vmatprep.subr.bf16.mxu0 0
      %846 = vmatpush1.bf16.msra.mxu0 0
      %847 = vmatprep.subr.bf16.mxu0 0
      %848 = vmatpush1.bf16.msra.mxu0 0
      %849 = vmatprep.subr.bf16.mxu0 0
      %850 = vmatpush1.bf16.msra.mxu0 0
      %851 = vmatprep.subr.bf16.mxu0 0
      %852 = vmatpush1.bf16.msra.mxu0 0
      %853 = vmatprep.subr.bf16.mxu0 0
      %854 = vmatpush1.bf16.msra.mxu0 0
      %855 = vmatprep.subr.bf16.mxu0 0
      %856 = vmatpush1.bf16.msra.mxu0 0
      %857 = vmatprep.subr.bf16.mxu0 0
      %858 = vmatpush1.bf16.msra.mxu0 0
      %859 = vmatprep.subr.bf16.mxu0 0
      %860 = vmatpush1.bf16.msra.mxu0 0
      %861 = vmatprep.subr.bf16.mxu0 0
      %862 = vmatpush1.bf16.msra.mxu0 0
      %863 = vmatprep.subr.bf16.mxu0 0
      %864 = vmatpush1.bf16.msra.mxu0 0
      %865 = vmatprep.mubr.bf16.mxu0 0
      %866 = vmatmul.mubr.bf16.gmra.mrb[0].mxu0 %v828
      %v867 = vpop.f32.mrb[0].mxu0
      %v868 = vadd.f32 0.0, %v867
      %v869 = vpop.f32.mrb[0].mxu0
      %v870 = vpop.f32.mrb[0].mxu0
      %v871 = vpop.f32.mrb[0].mxu0
      %872 = vdwg.mxu0
      %v874 = vsel %vm386, %v820, 0
      %v877 = vsel %vm629, %v824, 0
      %879 = vmatprep.subr.bf16.mxu0 0
      %880 = vmatpush1.bf16.msra.mxu0 %v877
      %881 = vmatprep.subr.bf16.mxu0 0
      %882 = vmatpush1.bf16.msra.mxu0 0
      %883 = vmatprep.subr.bf16.mxu0 0
      %884 = vmatpush1.bf16.msra.mxu0 0
      %885 = vmatprep.subr.bf16.mxu0 0
      %886 = vmatpush1.bf16.msra.mxu0 0
      %887 = vmatprep.subr.bf16.mxu0 0
      %888 = vmatpush1.bf16.msra.mxu0 0
      %889 = vmatprep.subr.bf16.mxu0 0
      %890 = vmatpush1.bf16.msra.mxu0 0
      %891 = vmatprep.subr.bf16.mxu0 0
      %892 = vmatpush1.bf16.msra.mxu0 0
      %893 = vmatprep.subr.bf16.mxu0 0
      %894 = vmatpush1.bf16.msra.mxu0 0
      %895 = vmatprep.subr.bf16.mxu0 0
      %896 = vmatpush1.bf16.msra.mxu0 0
      %897 = vmatprep.subr.bf16.mxu0 0
      %898 = vmatpush1.bf16.msra.mxu0 0
      %899 = vmatprep.subr.bf16.mxu0 0
      %900 = vmatpush1.bf16.msra.mxu0 0
      %901 = vmatprep.subr.bf16.mxu0 0
      %902 = vmatpush1.bf16.msra.mxu0 0
      %903 = vmatprep.subr.bf16.mxu0 0
      %904 = vmatpush1.bf16.msra.mxu0 0
      %905 = vmatprep.subr.bf16.mxu0 0
      %906 = vmatpush1.bf16.msra.mxu0 0
      %907 = vmatprep.subr.bf16.mxu0 0
      %908 = vmatpush1.bf16.msra.mxu0 0
      %909 = vmatprep.subr.bf16.mxu0 0
      %910 = vmatpush1.bf16.msra.mxu0 0
      %911 = vmatprep.mubr.bf16.mxu0 0
      %912 = vmatmul.mubr.bf16.gmra.mrb[0].mxu0 %v874
      %v913 = vpop.f32.mrb[0].mxu0
      %v914 = vadd.f32 0.0, %v913
      %v915 = vpop.f32.mrb[0].mxu0
      %v916 = vpop.f32.mrb[0].mxu0
      %v917 = vpop.f32.mrb[0].mxu0
      %918 = vdwg.mxu0
      %v920 = vsel %vm386, %v821, 0
      %v923 = vsel %vm629, %v825, 0
      %925 = vmatprep.subr.bf16.mxu0 0
      %926 = vmatpush1.bf16.msra.mxu0 %v923
      %927 = vmatprep.subr.bf16.mxu0 0
      %928 = vmatpush1.bf16.msra.mxu0 0
      %929 = vmatprep.subr.bf16.mxu0 0
      %930 = vmatpush1.bf16.msra.mxu0 0
      %931 = vmatprep.subr.bf16.mxu0 0
      %932 = vmatpush1.bf16.msra.mxu0 0
      %933 = vmatprep.subr.bf16.mxu0 0
      %934 = vmatpush1.bf16.msra.mxu0 0
      %935 = vmatprep.subr.bf16.mxu0 0
      %936 = vmatpush1.bf16.msra.mxu0 0
      %937 = vmatprep.subr.bf16.mxu0 0
      %938 = vmatpush1.bf16.msra.mxu0 0
      %939 = vmatprep.subr.bf16.mxu0 0
      %940 = vmatpush1.bf16.msra.mxu0 0
      %941 = vmatprep.subr.bf16.mxu0 0
      %942 = vmatpush1.bf16.msra.mxu0 0
      %943 = vmatprep.subr.bf16.mxu0 0
      %944 = vmatpush1.bf16.msra.mxu0 0
      %945 = vmatprep.subr.bf16.mxu0 0
      %946 = vmatpush1.bf16.msra.mxu0 0
      %947 = vmatprep.subr.bf16.mxu0 0
      %948 = vmatpush1.bf16.msra.mxu0 0
      %949 = vmatprep.subr.bf16.mxu0 0
      %950 = vmatpush1.bf16.msra.mxu0 0
      %951 = vmatprep.subr.bf16.mxu0 0
      %952 = vmatpush1.bf16.msra.mxu0 0
      %953 = vmatprep.subr.bf16.mxu0 0
      %954 = vmatpush1.bf16.msra.mxu0 0
      %955 = vmatprep.subr.bf16.mxu0 0
      %956 = vmatpush1.bf16.msra.mxu0 0
      %957 = vmatprep.mubr.bf16.mxu0 0
      %958 = vmatmul.mubr.bf16.gmra.mrb[0].mxu0 %v920
      %v959 = vpop.f32.mrb[0].mxu0
      %v960 = vadd.f32 0.0, %v959
      %v961 = vpop.f32.mrb[0].mxu0
      %v962 = vpop.f32.mrb[0].mxu0
      %v963 = vpop.f32.mrb[0].mxu0
      %964 = vdwg.mxu0
      %v966 = vsel %vm386, %v822, 0
      %v969 = vsel %vm629, %v826, 0
      %971 = vmatprep.subr.bf16.mxu0 0
      %972 = vmatpush1.bf16.msra.mxu0 %v969
      %973 = vmatprep.subr.bf16.mxu0 0
      %974 = vmatpush1.bf16.msra.mxu0 0
      %975 = vmatprep.subr.bf16.mxu0 0
      %976 = vmatpush1.bf16.msra.mxu0 0
      %977 = vmatprep.subr.bf16.mxu0 0
      %978 = vmatpush1.bf16.msra.mxu0 0
      %979 = vmatprep.subr.bf16.mxu0 0
      %980 = vmatpush1.bf16.msra.mxu0 0
      %981 = vmatprep.subr.bf16.mxu0 0
      %982 = vmatpush1.bf16.msra.mxu0 0
      %983 = vmatprep.subr.bf16.mxu0 0
      %984 = vmatpush1.bf16.msra.mxu0 0
      %985 = vmatprep.subr.bf16.mxu0 0
      %986 = vmatpush1.bf16.msra.mxu0 0
      %987 = vmatprep.subr.bf16.mxu0 0
      %988 = vmatpush1.bf16.msra.mxu0 0
      %989 = vmatprep.subr.bf16.mxu0 0
      %990 = vmatpush1.bf16.msra.mxu0 0
      %991 = vmatprep.subr.bf16.mxu0 0
      %992 = vmatpush1.bf16.msra.mxu0 0
      %993 = vmatprep.subr.bf16.mxu0 0
      %994 = vmatpush1.bf16.msra.mxu0 0
      %995 = vmatprep.subr.bf16.mxu0 0
      %996 = vmatpush1.bf16.msra.mxu0 0
      %997 = vmatprep.subr.bf16.mxu0 0
      %998 = vmatpush1.bf16.msra.mxu0 0
      %999 = vmatprep.subr.bf16.mxu0 0
      %1000 = vmatpush1.bf16.msra.mxu0 0
      %1001 = vmatprep.subr.bf16.mxu0 0
      %1002 = vmatpush1.bf16.msra.mxu0 0
      %1003 = vmatprep.mubr.bf16.mxu0 0
      %1004 = vmatmul.mubr.bf16.gmra.mrb[0].mxu0 %v966
      %v1005 = vpop.f32.mrb[0].mxu0
      %v1006 = vadd.f32 0.0, %v1005
      %v1007 = vpop.f32.mrb[0].mxu0
      %v1008 = vpop.f32.mrb[0].mxu0
      %v1009 = vpop.f32.mrb[0].mxu0
      %1010 = vdwg.mxu0
      %vm1011 = vcmask 261120
      %v1012 = vsel %vm1011, %v868, 0.0
      %v1013 = vsel %vm1011, %v914, 0.0
      %v1014 = vadd.f32 %v1012, %v1013
      %v1015 = vsel %vm1011, %v960, 0.0
      %v1016 = vadd.f32 %v1014, %v1015
      %v1017 = vsel %vm1011, %v1006, 0.0
      %v1018 = vadd.f32 %v1016, %v1017
      %v1019 = vld [vmem:[%s5] sm:$0x1]
      %v1021 = vlaneseq
      %v1022 = vshrl.u32 %v1021, 7
      %v1023 = vsub.s32 0, %v1022
      %v1024 = vrot.slane %v1019, %v1023
      %v1026 = vadd.f32 %v1018, %v1024
      %v1027 = vld [vmem:[%s341] sm:$0xff]
      %v1028 = vadd.f32 %v1027, %v1026
      %v1029 = vsel %vm1011, %v1028, 0.0
      %1030 = vadd.xlane.f32.xlu0 %v1029
      %v1031 = vpop.xlane.xlu0 %1030
      %v1032 = vrcp.pop 32.0
      %v1033 = vmul.f32 %v1031, %v1032
      %v1034 = vsub.f32 %v1028, %v1033
      %v1035 = vmul.f32 %v1034, %v1034
      %v1036 = vsel %vm1011, %v1035, 0.0
      %1037 = vadd.xlane.f32.xlu0 %v1036
      %v1038 = vpop.xlane.xlu0 %1037
      %v1039 = vmul.f32 %v1038, %v1032
      %v1040 = vadd.f32 %v1039, 1e-05
      %v1041 = vrsqrt.pop %v1040
      %v1042 = vmul.f32 %v1034, %v1041
      %v1043 = vld [vmem:[%s6] sm:$0x1]
      %v1045 = vlaneseq
      %v1046 = vshrl.u32 %v1045, 7
      %v1047 = vsub.s32 0, %v1046
      %v1048 = vrot.slane %v1043, %v1047
      %v1050 = vmul.f32 %v1042, %v1048
      %v1051 = vld [vmem:[%s7] sm:$0x1]
      %v1053 = vlaneseq
      %v1054 = vshrl.u32 %v1053, 7
      %v1055 = vsub.s32 0, %v1054
      %v1056 = vrot.slane %v1051, %v1055
      %v1058 = vadd.f32 %v1050, %v1056
      %1059 = vst.msk [vmem:[%s360] sm:$0xff] %vm1011, %v1058
      %p1060 = scmp.lt.s32.totalorder %s19, 1
      %s1061 = scalar_select %p1060, %s19, 1
      %s1062 = smul.addr %s1061, 8
      %s1063 = scalar_lea.vmem %s8, %s1062
      // Predicated region
      $region53: #{gpt_forward.8} parent=51 // pred_check
        %p1064 = pneg %p225
      $region54: #{gpt_forward.8} parent=51 // pred_check_branch
        %1066 = sbr.rel (%p1064) target = $region56
      $region55: #{gpt_forward.8} parent=51 // pred_region
        _
      $region56: #{gpt_forward.8} parent=51 // pred_fallthru
        _
    $region52: #{gpt_forward.8} parent=5 // pred_fallthru
      _
    %p1067 = scmp.le.s32.totalorder 2, %s14
    // Predicated region
    $region57: #{gpt_forward.8} parent=5 // pred_check
      %p1068 = pneg %p1067
    $region58: #{gpt_forward.8} parent=5 // pred_check_branch
      %1070 = sbr.rel (%p1068) target = $region60
    $region59: #{gpt_forward.8} parent=5 // pred_region
      %s1071 = ssub.s32 %s14, 2
      // Predicated region
      $region61: #{gpt_forward.8} parent=59 // pred_check
        %p1072 = pneg %p231
      $region62: #{gpt_forward.8} parent=59 // pred_check_branch
        %1074 = sbr.rel (%p1072) target = $region64
      $region63: #{gpt_forward.8} parent=59 // pred_region
        %p1075 = scmp.lt.s32.totalorder %s20, 1
        %s1076 = scalar_select %p1075, %s20, 1
        %s1077 = smul.addr %s1076, 8
        %s1078 = scalar_lea.vmem %s8, %s1077
      $region64: #{gpt_forward.8} parent=59 // pred_fallthru
        _
    $region60: #{gpt_forward.8} parent=5 // pred_fallthru
      _
  $region6: #{gpt_forward.8} parent=0 // loop_footer
    %s18 = sadd.s32 1, %s14
  $region7: #{gpt_forward.8} parent=0 // loop_footer_branch
    %13 = sbr.rel target = $region3
  $region8: #{gpt_forward.8} parent=0 // loop_exit
    _

</llo_original>
